<compile_context>
chip_gen: v7x
topology: tpu7x:2x2x1
jax: 0.10.0
libtpu: 0.0.40
codegen_flags: <defaults>
</compile_context>

<pallas_src>
import functools
import math

import jax
import jax.numpy as jnp
from jax import lax
from jax.experimental import pallas as pl
from jax.experimental.pallas import tpu as pltpu


# ----------------------------------------------------------------------------
# in-kernel math helpers (only ops guaranteed to lower in Mosaic)
# ----------------------------------------------------------------------------
_SQRT_HALF = 0.7071067811865476


def _erf(x):
    # Abramowitz & Stegun 7.1.26 polynomial erf (max abs err ~1.5e-7).
    # TODO(synk): replace with lax.erf if/when a Mosaic lowering is guaranteed.
    p = 0.3275911
    a1, a2, a3, a4, a5 = (0.254829592, -0.284496736, 1.421413741,
                          -1.453152027, 1.061405429)
    ax = jnp.abs(x)
    t = 1.0 / (1.0 + p * ax)
    poly = ((((a5 * t + a4) * t + a3) * t + a2) * t + a1) * t
    y = 1.0 - poly * jnp.exp(-ax * ax)
    return jnp.where(x >= 0.0, y, -y)


def _gelu_exact(x):
    # F.gelu default (exact erf form).
    return 0.5 * x * (1.0 + _erf(x * _SQRT_HALF))


def _layernorm(x, g, b, eps=1e-5):
    mean = jnp.mean(x, axis=-1, keepdims=True)
    xc = x - mean
    var = jnp.mean(xc * xc, axis=-1, keepdims=True)
    return xc * lax.rsqrt(var + eps) * g + b


def _bf(x):
    return x.astype(jnp.bfloat16)


# ----------------------------------------------------------------------------
# fused per-layer kernel: grid = (batch, row_tile)
# ----------------------------------------------------------------------------
def linformer_layer_kernel(
        xf_ref, x_ref,                                  # x: full seq / row tile
        tq_ref, tk_ref, tv_ref,                         # shared to_q/k/v (C, D)
        wq_ref, bq_ref, wk_ref, bk_ref, wv_ref, bv_ref, # stacked heads (D, H*D)
        ew_ref, eb_ref,                                 # shared E=F (ck, N)
        wo_ref, wob_ref,                                # (H*D, C)
        g1_ref, bn1_ref,                                # LN1
        w1_ref, fb1_ref, w2_ref, fb2_ref,               # FF (C,F) / (F,C)
        g2_ref, bn2_ref,                                # LN2
        o_ref,
        qw_scr, kc_scr, vc_scr, at_scr):
    N, _ = xf_ref.shape
    tn = x_ref.shape[0]
    dim_d = tq_ref.shape[1]
    hd = wq_ref.shape[1]
    nhead = hd // dim_d
    ck = ew_ref.shape[0]
    n_chunks = N // tn
    r = pl.program_id(1)

    # --- K/V path (sequence-global, tiny compressed result): once per batch
    # element, chunked over rows to bound live ranges, kept in VMEM scratch.
    @pl.when(r == 0)
    def _compress_kv():
        kc = jnp.zeros((ck, hd), jnp.float32)
        vc = jnp.zeros((ck, hd), jnp.float32)
        for c in range(n_chunks):                    # static unroll
            rows = slice(c * tn, (c + 1) * tn)
            xs = _bf(xf_ref[rows, :])                                    # (tn,C)
            k_sh = jnp.dot(xs, tk_ref[...],
                           preferred_element_type=jnp.float32)           # (tn,D)
            v_sh = jnp.dot(xs, tv_ref[...],
                           preferred_element_type=jnp.float32)
            kw = jnp.dot(_bf(k_sh), wk_ref[...],
                         preferred_element_type=jnp.float32) + bk_ref[...]
            vw = jnp.dot(_bf(v_sh), wv_ref[...],
                         preferred_element_type=jnp.float32) + bv_ref[...]
            ew_c = ew_ref[:, rows]                                       # (ck,tn)
            kc = kc + jnp.dot(ew_c, _bf(kw), preferred_element_type=jnp.float32)
            vc = vc + jnp.dot(ew_c, _bf(vw), preferred_element_type=jnp.float32)
        kc_scr[...] = (kc + eb_ref[...]).astype(kc_scr.dtype)   # (ck, H*D)
        vc_scr[...] = (vc + eb_ref[...]).astype(vc_scr.dtype)

    # --- Q path + attention + w_o + LN1 + FF + LN2 for this row tile.
    x = x_ref[...].astype(jnp.float32)                                   # (tn,C)
    q_sh = jnp.dot(_bf(x), tq_ref[...],
                   preferred_element_type=jnp.float32)                   # (tn,D)
    qw = jnp.dot(_bf(q_sh), wq_ref[...],
                 preferred_element_type=jnp.float32) + bq_ref[...]       # (tn,HD)
    qw_scr[...] = qw.astype(qw_scr.dtype)

    scale = 1.0 / math.sqrt(float(dim_d))
    for h in range(nhead):                            # static unroll over heads
        sl = slice(h * dim_d, (h + 1) * dim_d)
        q_h = qw_scr[:, sl]                           # (tn, D)  bf16 ref slice
        kc_h = kc_scr[:, sl]                          # (ck, D)
        vc_h = vc_scr[:, sl]                          # (ck, D)
        s = lax.dot_general(q_h, kc_h, (((1,), (1,)), ((), ())),
                            preferred_element_type=jnp.float32) * scale  # (tn,ck)
        s = s - jnp.max(s, axis=-1, keepdims=True)
        e = jnp.exp(s)
        p = e * pl.reciprocal(jnp.sum(e, axis=-1, keepdims=True), approx=True)
        # TODO(synk): attention-weight dropout is identity (eval-mode semantics).
        out_h = jnp.dot(_bf(p), vc_h,
                        preferred_element_type=jnp.float32)              # (tn,D)
        at_scr[:, sl] = out_h.astype(at_scr.dtype)

    attn = jnp.dot(at_scr[...], wo_ref[...],
                   preferred_element_type=jnp.float32) + wob_ref[...]    # (tn,C)

    # residual + LayerNorm 1
    h1 = _layernorm(attn + x, g1_ref[...], bn1_ref[...])

    # FeedForward (exact erf gelu) + residual + LayerNorm 2.
    # TODO(synk): FeedForward dropout is identity (eval-mode semantics).
    f = jnp.dot(_bf(h1), w1_ref[...],
                preferred_element_type=jnp.float32) + fb1_ref[...]       # (tn,F)
    f = _gelu_exact(f)
    f = jnp.dot(_bf(f), w2_ref[...],
                preferred_element_type=jnp.float32) + fb2_ref[...]       # (tn,C)
    o_ref[...] = _layernorm(f + h1, g2_ref[...], bn2_ref[...]).astype(o_ref.dtype)


def _row_tile(N, C):
    # Row tiles must satisfy the (8,128) constraint unless they span full dims.
    if C % 128 != 0 or N <= 512:
        return N
    for t in (512, 256, 128):
        if N % t == 0:
            return t
    return N


def linformer_layer(x, lp, *, dim_d, nhead):
    B, N, C = x.shape
    HD = nhead * dim_d
    ck = lp["EF_w"].shape[0]            # compression length (= dim_d per module)
    Fd = lp["ff_w1"].shape[0]
    bf = jnp.bfloat16

    # Pre-transpose every matmul weight to (in, out) and cast to bf16 (MXU).
    to_q = lp["to_q_w"].T.astype(bf)                              # (C, D)
    to_k = lp["to_k_w"].T.astype(bf)
    to_v = lp["to_v_w"].T.astype(bf)
    wq = jnp.concatenate([h["wq_w"].T for h in lp["heads"]], axis=1).astype(bf)
    wk = jnp.concatenate([h["wk_w"].T for h in lp["heads"]], axis=1).astype(bf)
    wv = jnp.concatenate([h["wv_w"].T for h in lp["heads"]], axis=1).astype(bf)
    bq = jnp.concatenate([h["wq_b"] for h in lp["heads"]]).reshape(1, HD)
    bk = jnp.concatenate([h["wk_b"] for h in lp["heads"]]).reshape(1, HD)
    bv = jnp.concatenate([h["wv_b"] for h in lp["heads"]]).reshape(1, HD)
    ew = lp["EF_w"].astype(bf)                                    # (ck, N)
    eb = lp["EF_b"].reshape(ck, 1)                                # f32
    wo = lp["wo_w"].T.astype(bf)                                  # (H*D, C)
    wob = lp["wo_b"].reshape(1, C)
    w1 = lp["ff_w1"].T.astype(bf)                                 # (C, F)
    fb1 = lp["ff_b1"].reshape(1, Fd)
    w2 = lp["ff_w2"].T.astype(bf)                                 # (F, C)
    fb2 = lp["ff_b2"].reshape(1, C)
    g1 = lp["ln1_g"].reshape(1, C)
    bn1 = lp["ln1_b"].reshape(1, C)
    g2 = lp["ln2_g"].reshape(1, C)
    bn2 = lp["ln2_b"].reshape(1, C)

    tn = _row_tile(N, C)
    R = N // tn

    def wspec(shp):
        # constant index_map -> weight stays VMEM-resident across the grid
        return pl.BlockSpec(shp, lambda b, r: (0,) * len(shp))

    in_specs = [
        pl.BlockSpec((None, N, C), lambda b, r: (b, 0, 0)),   # full-seq x (K/V)
        pl.BlockSpec((None, tn, C), lambda b, r: (b, r, 0)),  # row tile x (Q/res)
        wspec((C, dim_d)), wspec((C, dim_d)), wspec((C, dim_d)),
        wspec((dim_d, HD)), wspec((1, HD)),
        wspec((dim_d, HD)), wspec((1, HD)),
        wspec((dim_d, HD)), wspec((1, HD)),
        wspec((ck, N)), wspec((ck, 1)),
        wspec((HD, C)), wspec((1, C)),
        wspec((1, C)), wspec((1, C)),
        wspec((C, Fd)), wspec((1, Fd)),
        wspec((Fd, C)), wspec((1, C)),
        wspec((1, C)), wspec((1, C)),
    ]
    scratch_shapes = [
        pltpu.VMEM((tn, HD), bf),   # stacked per-head q projections
        pltpu.VMEM((ck, HD), bf),   # compressed K (persistent per batch elem)
        pltpu.VMEM((ck, HD), bf),   # compressed V
        pltpu.VMEM((tn, HD), bf),   # per-head attention outputs (pre-w_o)
    ]

    return pl.pallas_call(
        linformer_layer_kernel,
        out_shape=jax.ShapeDtypeStruct((B, N, C), x.dtype),
        grid=(B, R),
        in_specs=in_specs,
        out_specs=pl.BlockSpec((None, tn, C), lambda b, r: (b, r, 0)),
        scratch_shapes=scratch_shapes,
        compiler_params=pltpu.CompilerParams(
            dimension_semantics=("parallel", "arbitrary"),
            vmem_limit_bytes=64 * 1024 * 1024),
    )(x, x,
      to_q, to_k, to_v,
      wq, bq, wk, bk, wv, bv,
      ew, eb,
      wo, wob,
      g1, bn1,
      w1, fb1, w2, fb2,
      g2, bn2)


# ----------------------------------------------------------------------------
# model glue (params, pos-emb, layer loop)
# ----------------------------------------------------------------------------
def positional_embedding(n, channels, dtype=jnp.float32):
    # Matches the module: base 100000, concat([sin, cos]) along channels.
    inv_freq = 1.0 / (100000.0 ** (jnp.arange(0, channels, 2, dtype=jnp.float32)
                                   / channels))
    pos = jnp.arange(n, dtype=jnp.float32)
    sin_inp = jnp.einsum("i,j->ij", pos, inv_freq)
    emb = jnp.concatenate([jnp.sin(sin_inp), jnp.cos(sin_inp)], axis=-1)
    return emb.astype(dtype)


def init_params(key, *, input_size, channels, dim_k, dim_ff, dim_d, nhead, depth):
    # NOTE: per the reference module, the shared E (=F) projection is
    # nn.Linear(input_size, dim) with dim == dim_d (get_EF(input_size, dim));
    # `dim_k` is stored on the module but unused by the forward math.
    del dim_k

    def uniform_linear(k, fan_out, fan_in, bias=True):
        bound = 1.0 / math.sqrt(fan_in)
        kw, kb = jax.random.split(k)
        w = jax.random.uniform(kw, (fan_out, fan_in), jnp.float32, -bound, bound)
        b = (jax.random.uniform(kb, (fan_out,), jnp.float32, -bound, bound)
             if bias else None)
        return w, b

    layers = []
    for lk in jax.random.split(key, depth):
        ks = jax.random.split(lk, 8 + nhead)
        std = math.sqrt(2.0 / (input_size + dim_d))           # xavier-normal
        EF_w = std * jax.random.normal(ks[0], (dim_d, input_size), jnp.float32)
        bnd = 1.0 / math.sqrt(input_size)
        EF_b = jax.random.uniform(ks[1], (dim_d,), jnp.float32, -bnd, bnd)
        heads = []
        for h in range(nhead):
            hk = jax.random.split(ks[2 + h], 3)
            wq_w, wq_b = uniform_linear(hk[0], dim_d, dim_d)
            wk_w, wk_b = uniform_linear(hk[1], dim_d, dim_d)
            wv_w, wv_b = uniform_linear(hk[2], dim_d, dim_d)
            heads.append(dict(wq_w=wq_w, wq_b=wq_b, wk_w=wk_w, wk_b=wk_b,
                              wv_w=wv_w, wv_b=wv_b))
        wo_w, wo_b = uniform_linear(ks[2 + nhead], channels, dim_d * nhead)
        to_q_w, _ = uniform_linear(ks[3 + nhead], dim_d, channels, bias=False)
        to_k_w, _ = uniform_linear(ks[4 + nhead], dim_d, channels, bias=False)
        to_v_w, _ = uniform_linear(ks[5 + nhead], dim_d, channels, bias=False)
        ff_w1, ff_b1 = uniform_linear(ks[6 + nhead], dim_ff, channels)
        ff_w2, ff_b2 = uniform_linear(ks[7 + nhead], channels, dim_ff)
        layers.append(dict(
            EF_w=EF_w, EF_b=EF_b, heads=heads, wo_w=wo_w, wo_b=wo_b,
            to_q_w=to_q_w, to_k_w=to_k_w, to_v_w=to_v_w,
            ln1_g=jnp.ones((channels,), jnp.float32),
            ln1_b=jnp.zeros((channels,), jnp.float32),
            ff_w1=ff_w1, ff_b1=ff_b1, ff_w2=ff_w2, ff_b2=ff_b2,
            ln2_g=jnp.ones((channels,), jnp.float32),
            ln2_b=jnp.zeros((channels,), jnp.float32)))
    return dict(layers=layers)


def linformer_forward(x, params, *, dim_d, nhead):
    B, N, C = x.shape
    pos = positional_embedding(N, C, x.dtype)
    x = x + pos[None, :, :]       # tiny broadcast add; no dedicated kernel
    for lp in params["layers"]:
        x = linformer_layer(x, lp, dim_d=dim_d, nhead=nhead)
    return x


# ----------------------------------------------------------------------------
if __name__ == "__main__":
    # small, forward-consistent shapes:
    B, N, C = 2, 8, 32              # batch, seq_len (= input_size), channels
    dim_k, dim_ff, dim_d, nhead, depth = 8, 64, 16, 2, 2

    key = jax.random.PRNGKey(0)
    kx, kp = jax.random.split(key)
    x = jax.random.normal(kx, (B, N, C), jnp.float32)
    params = init_params(kp, input_size=N, channels=C, dim_k=dim_k,
                         dim_ff=dim_ff, dim_d=dim_d, nhead=nhead, depth=depth)

    fwd = jax.jit(functools.partial(linformer_forward, dim_d=dim_d, nhead=nhead))
    out = jax.block_until_ready(fwd(x, params))
    assert out.shape == (B, N, C) and out.dtype == jnp.float32
    assert bool(jnp.all(jnp.isfinite(out)))
    print("KERNEL_OK")
</pallas_src>

<mosaic_0001>
module attributes {stable_mosaic.version = 11 : i64} {
  func.func @linformer_layer_kernel(%arg0: i32, %arg1: i32, %arg2: memref<1x8x32xf32, #tpu.memory_space<vmem>>, %arg3: memref<1x8x32xf32, #tpu.memory_space<vmem>>, %arg4: memref<32x16xbf16, #tpu.memory_space<vmem>>, %arg5: memref<32x16xbf16, #tpu.memory_space<vmem>>, %arg6: memref<32x16xbf16, #tpu.memory_space<vmem>>, %arg7: memref<16x32xbf16, #tpu.memory_space<vmem>>, %arg8: memref<1x32xf32, #tpu.memory_space<vmem>>, %arg9: memref<16x32xbf16, #tpu.memory_space<vmem>>, %arg10: memref<1x32xf32, #tpu.memory_space<vmem>>, %arg11: memref<16x32xbf16, #tpu.memory_space<vmem>>, %arg12: memref<1x32xf32, #tpu.memory_space<vmem>>, %arg13: memref<16x8xbf16, #tpu.memory_space<vmem>>, %arg14: memref<16x1xf32, #tpu.memory_space<vmem>>, %arg15: memref<32x32xbf16, #tpu.memory_space<vmem>>, %arg16: memref<1x32xf32, #tpu.memory_space<vmem>>, %arg17: memref<1x32xf32, #tpu.memory_space<vmem>>, %arg18: memref<1x32xf32, #tpu.memory_space<vmem>>, %arg19: memref<32x64xbf16, #tpu.memory_space<vmem>>, %arg20: memref<1x64xf32, #tpu.memory_space<vmem>>, %arg21: memref<64x32xbf16, #tpu.memory_space<vmem>>, %arg22: memref<1x32xf32, #tpu.memory_space<vmem>>, %arg23: memref<1x32xf32, #tpu.memory_space<vmem>>, %arg24: memref<1x32xf32, #tpu.memory_space<vmem>>, %arg25: memref<1x8x32xf32, #tpu.memory_space<vmem>>, %arg26: memref<8x32xbf16, #tpu.memory_space<vmem>>, %arg27: memref<16x32xbf16, #tpu.memory_space<vmem>>, %arg28: memref<16x32xbf16, #tpu.memory_space<vmem>>, %arg29: memref<8x32xbf16, #tpu.memory_space<vmem>>) attributes {dimension_semantics = [#tpu.dimension_semantics<parallel>, #tpu.dimension_semantics<arbitrary>], iteration_bounds = array<i64: 2, 1>, scalar_prefetch = 0 : i64, scratch_operands = 4 : i64, tpu.core_type = #tpu.core_type<tc>, window_params = [{transform_indices = @transform_0, window_bounds = array<i64: 1, 8, 32>}, {transform_indices = @transform_1, window_bounds = array<i64: 1, 8, 32>}, {pipeline_mode = #tpu.pipeline_mode<synchronous>, transform_indices = @transform_2, window_bounds = array<i64: 32, 16>}, {pipeline_mode = #tpu.pipeline_mode<synchronous>, transform_indices = @transform_3, window_bounds = array<i64: 32, 16>}, {pipeline_mode = #tpu.pipeline_mode<synchronous>, transform_indices = @transform_4, window_bounds = array<i64: 32, 16>}, {pipeline_mode = #tpu.pipeline_mode<synchronous>, transform_indices = @transform_5, window_bounds = array<i64: 16, 32>}, {pipeline_mode = #tpu.pipeline_mode<synchronous>, transform_indices = @transform_6, window_bounds = array<i64: 1, 32>}, {pipeline_mode = #tpu.pipeline_mode<synchronous>, transform_indices = @transform_7, window_bounds = array<i64: 16, 32>}, {pipeline_mode = #tpu.pipeline_mode<synchronous>, transform_indices = @transform_8, window_bounds = array<i64: 1, 32>}, {pipeline_mode = #tpu.pipeline_mode<synchronous>, transform_indices = @transform_9, window_bounds = array<i64: 16, 32>}, {pipeline_mode = #tpu.pipeline_mode<synchronous>, transform_indices = @transform_10, window_bounds = array<i64: 1, 32>}, {pipeline_mode = #tpu.pipeline_mode<synchronous>, transform_indices = @transform_11, window_bounds = array<i64: 16, 8>}, {pipeline_mode = #tpu.pipeline_mode<synchronous>, transform_indices = @transform_12, window_bounds = array<i64: 16, 1>}, {pipeline_mode = #tpu.pipeline_mode<synchronous>, transform_indices = @transform_13, window_bounds = array<i64: 32, 32>}, {pipeline_mode = #tpu.pipeline_mode<synchronous>, transform_indices = @transform_14, window_bounds = array<i64: 1, 32>}, {pipeline_mode = #tpu.pipeline_mode<synchronous>, transform_indices = @transform_15, window_bounds = array<i64: 1, 32>}, {pipeline_mode = #tpu.pipeline_mode<synchronous>, transform_indices = @transform_16, window_bounds = array<i64: 1, 32>}, {pipeline_mode = #tpu.pipeline_mode<synchronous>, transform_indices = @transform_17, window_bounds = array<i64: 32, 64>}, {pipeline_mode = #tpu.pipeline_mode<synchronous>, transform_indices = @transform_18, window_bounds = array<i64: 1, 64>}, {pipeline_mode = #tpu.pipeline_mode<synchronous>, transform_indices = @transform_19, window_bounds = array<i64: 64, 32>}, {pipeline_mode = #tpu.pipeline_mode<synchronous>, transform_indices = @transform_20, window_bounds = array<i64: 1, 32>}, {pipeline_mode = #tpu.pipeline_mode<synchronous>, transform_indices = @transform_21, window_bounds = array<i64: 1, 32>}, {pipeline_mode = #tpu.pipeline_mode<synchronous>, transform_indices = @transform_22, window_bounds = array<i64: 1, 32>}, {transform_indices = @transform_23, window_bounds = array<i64: 1, 8, 32>}]} {
    %c0_i32 = arith.constant 0 : i32
    %0 = arith.cmpi eq, %arg1, %c0_i32 : i32
    %1 = arith.extui %0 : i1 to i32
    %c0_i32_0 = arith.constant 0 : i32
    %2 = arith.cmpi ne, %1, %c0_i32_0 : i32
    scf.if %2 {
      %cst_90 = arith.constant 0.000000e+00 : f32
      %163 = vector.broadcast %cst_90 : f32 to vector<16x32xf32>
      %cst_91 = arith.constant 0.000000e+00 : f32
      %164 = vector.broadcast %cst_91 : f32 to vector<16x32xf32>
      %c0_92 = arith.constant 0 : index
      %c0_93 = arith.constant 0 : index
      %c0_94 = arith.constant 0 : index
      %165 = vector.load %arg2[%c0_92, %c0_93, %c0_94] : memref<1x8x32xf32, #tpu.memory_space<vmem>>, vector<1x8x32xf32>
      %166 = vector.shape_cast %165 : vector<1x8x32xf32> to vector<8x32xf32>
      %167 = arith.truncf %166 : vector<8x32xf32> to vector<8x32xbf16>
      %c0_95 = arith.constant 0 : index
      %c0_96 = arith.constant 0 : index
      %168 = vector.load %arg5[%c0_95, %c0_96] : memref<32x16xbf16, #tpu.memory_space<vmem>>, vector<32x16xbf16>
      %cst_97 = arith.constant dense<0.000000e+00> : vector<8x16xf32>
      %169 = tpu.matmul %167, %168, %cst_97 {dimension_numbers = #tpu.dot_dimension_numbers<[1], [0], [0], [1], [0, 0, 1, 1], [], []>} : vector<8x32xbf16>, vector<32x16xbf16>, vector<8x16xf32> -> vector<8x16xf32>
      %c0_98 = arith.constant 0 : index
      %c0_99 = arith.constant 0 : index
      %170 = vector.load %arg6[%c0_98, %c0_99] : memref<32x16xbf16, #tpu.memory_space<vmem>>, vector<32x16xbf16>
      %cst_100 = arith.constant dense<0.000000e+00> : vector<8x16xf32>
      %171 = tpu.matmul %167, %170, %cst_100 {dimension_numbers = #tpu.dot_dimension_numbers<[1], [0], [0], [1], [0, 0, 1, 1], [], []>} : vector<8x32xbf16>, vector<32x16xbf16>, vector<8x16xf32> -> vector<8x16xf32>
      %172 = arith.truncf %169 : vector<8x16xf32> to vector<8x16xbf16>
      %c0_101 = arith.constant 0 : index
      %c0_102 = arith.constant 0 : index
      %173 = vector.load %arg9[%c0_101, %c0_102] : memref<16x32xbf16, #tpu.memory_space<vmem>>, vector<16x32xbf16>
      %cst_103 = arith.constant dense<0.000000e+00> : vector<8x32xf32>
      %174 = tpu.matmul %172, %173, %cst_103 {dimension_numbers = #tpu.dot_dimension_numbers<[1], [0], [0], [1], [0, 0, 1, 1], [], []>} : vector<8x16xbf16>, vector<16x32xbf16>, vector<8x32xf32> -> vector<8x32xf32>
      %c0_104 = arith.constant 0 : index
      %c0_105 = arith.constant 0 : index
      %175 = vector.load %arg10[%c0_104, %c0_105] : memref<1x32xf32, #tpu.memory_space<vmem>>, vector<1x32xf32>
      %176 = vector.broadcast %175 : vector<1x32xf32> to vector<8x32xf32>
      %177 = arith.addf %174, %176 : vector<8x32xf32>
      %178 = arith.truncf %171 : vector<8x16xf32> to vector<8x16xbf16>
      %c0_106 = arith.constant 0 : index
      %c0_107 = arith.constant 0 : index
      %179 = vector.load %arg11[%c0_106, %c0_107] : memref<16x32xbf16, #tpu.memory_space<vmem>>, vector<16x32xbf16>
      %cst_108 = arith.constant dense<0.000000e+00> : vector<8x32xf32>
      %180 = tpu.matmul %178, %179, %cst_108 {dimension_numbers = #tpu.dot_dimension_numbers<[1], [0], [0], [1], [0, 0, 1, 1], [], []>} : vector<8x16xbf16>, vector<16x32xbf16>, vector<8x32xf32> -> vector<8x32xf32>
      %c0_109 = arith.constant 0 : index
      %c0_110 = arith.constant 0 : index
      %181 = vector.load %arg12[%c0_109, %c0_110] : memref<1x32xf32, #tpu.memory_space<vmem>>, vector<1x32xf32>
      %182 = vector.broadcast %181 : vector<1x32xf32> to vector<8x32xf32>
      %183 = arith.addf %180, %182 : vector<8x32xf32>
      %c0_111 = arith.constant 0 : index
      %c0_112 = arith.constant 0 : index
      %184 = vector.load %arg13[%c0_111, %c0_112] : memref<16x8xbf16, #tpu.memory_space<vmem>>, vector<16x8xbf16>
      %185 = arith.truncf %177 : vector<8x32xf32> to vector<8x32xbf16>
      %cst_113 = arith.constant dense<0.000000e+00> : vector<16x32xf32>
      %186 = tpu.matmul %184, %185, %cst_113 {dimension_numbers = #tpu.dot_dimension_numbers<[1], [0], [0], [1], [0, 0, 1, 1], [], []>} : vector<16x8xbf16>, vector<8x32xbf16>, vector<16x32xf32> -> vector<16x32xf32>
      %187 = arith.addf %163, %186 : vector<16x32xf32>
      %188 = arith.truncf %183 : vector<8x32xf32> to vector<8x32xbf16>
      %cst_114 = arith.constant dense<0.000000e+00> : vector<16x32xf32>
      %189 = tpu.matmul %184, %188, %cst_114 {dimension_numbers = #tpu.dot_dimension_numbers<[1], [0], [0], [1], [0, 0, 1, 1], [], []>} : vector<16x8xbf16>, vector<8x32xbf16>, vector<16x32xf32> -> vector<16x32xf32>
      %190 = arith.addf %164, %189 : vector<16x32xf32>
      %c0_115 = arith.constant 0 : index
      %c0_116 = arith.constant 0 : index
      %191 = vector.load %arg14[%c0_115, %c0_116] : memref<16x1xf32, #tpu.memory_space<vmem>>, vector<16x1xf32>
      %192 = vector.broadcast %191 : vector<16x1xf32> to vector<16x32xf32>
      %193 = arith.addf %187, %192 : vector<16x32xf32>
      %194 = arith.truncf %193 : vector<16x32xf32> to vector<16x32xbf16>
      %c0_117 = arith.constant 0 : index
      %c0_118 = arith.constant 0 : index
      %195 = vector.load %arg27[%c0_117, %c0_118] : memref<16x32xbf16, #tpu.memory_space<vmem>>, vector<16x32xbf16>
      tpu.vector_store %arg27[%c0_117, %c0_118], %194 {strides = array<i32>} : memref<16x32xbf16, #tpu.memory_space<vmem>>, vector<16x32xbf16>,
      %c0_119 = arith.constant 0 : index
      %c0_120 = arith.constant 0 : index
      %196 = vector.load %arg14[%c0_119, %c0_120] : memref<16x1xf32, #tpu.memory_space<vmem>>, vector<16x1xf32>
      %197 = vector.broadcast %196 : vector<16x1xf32> to vector<16x32xf32>
      %198 = arith.addf %190, %197 : vector<16x32xf32>
      %199 = arith.truncf %198 : vector<16x32xf32> to vector<16x32xbf16>
      %c0_121 = arith.constant 0 : index
      %c0_122 = arith.constant 0 : index
      %200 = vector.load %arg28[%c0_121, %c0_122] : memref<16x32xbf16, #tpu.memory_space<vmem>>, vector<16x32xbf16>
      tpu.vector_store %arg28[%c0_121, %c0_122], %199 {strides = array<i32>} : memref<16x32xbf16, #tpu.memory_space<vmem>>, vector<16x32xbf16>,
    } else {
    }
    %c0 = arith.constant 0 : index
    %c0_1 = arith.constant 0 : index
    %c0_2 = arith.constant 0 : index
    %3 = vector.load %arg3[%c0, %c0_1, %c0_2] : memref<1x8x32xf32, #tpu.memory_space<vmem>>, vector<1x8x32xf32>
    %4 = vector.shape_cast %3 : vector<1x8x32xf32> to vector<8x32xf32>
    %5 = arith.truncf %4 : vector<8x32xf32> to vector<8x32xbf16>
    %c0_3 = arith.constant 0 : index
    %c0_4 = arith.constant 0 : index
    %6 = vector.load %arg4[%c0_3, %c0_4] : memref<32x16xbf16, #tpu.memory_space<vmem>>, vector<32x16xbf16>
    %cst = arith.constant dense<0.000000e+00> : vector<8x16xf32>
    %7 = tpu.matmul %5, %6, %cst {dimension_numbers = #tpu.dot_dimension_numbers<[1], [0], [0], [1], [0, 0, 1, 1], [], []>} : vector<8x32xbf16>, vector<32x16xbf16>, vector<8x16xf32> -> vector<8x16xf32>
    %8 = arith.truncf %7 : vector<8x16xf32> to vector<8x16xbf16>
    %c0_5 = arith.constant 0 : index
    %c0_6 = arith.constant 0 : index
    %9 = vector.load %arg7[%c0_5, %c0_6] : memref<16x32xbf16, #tpu.memory_space<vmem>>, vector<16x32xbf16>
    %cst_7 = arith.constant dense<0.000000e+00> : vector<8x32xf32>
    %10 = tpu.matmul %8, %9, %cst_7 {dimension_numbers = #tpu.dot_dimension_numbers<[1], [0], [0], [1], [0, 0, 1, 1], [], []>} : vector<8x16xbf16>, vector<16x32xbf16>, vector<8x32xf32> -> vector<8x32xf32>
    %c0_8 = arith.constant 0 : index
    %c0_9 = arith.constant 0 : index
    %11 = vector.load %arg8[%c0_8, %c0_9] : memref<1x32xf32, #tpu.memory_space<vmem>>, vector<1x32xf32>
    %12 = vector.broadcast %11 : vector<1x32xf32> to vector<8x32xf32>
    %13 = arith.addf %10, %12 : vector<8x32xf32>
    %14 = arith.truncf %13 : vector<8x32xf32> to vector<8x32xbf16>
    %c0_10 = arith.constant 0 : index
    %c0_11 = arith.constant 0 : index
    %15 = vector.load %arg26[%c0_10, %c0_11] : memref<8x32xbf16, #tpu.memory_space<vmem>>, vector<8x32xbf16>
    tpu.vector_store %arg26[%c0_10, %c0_11], %14 {strides = array<i32>} : memref<8x32xbf16, #tpu.memory_space<vmem>>, vector<8x32xbf16>,
    %c0_12 = arith.constant 0 : index
    %c0_13 = arith.constant 0 : index
    %16 = vector.load %arg26[%c0_12, %c0_13] : memref<8x32xbf16, #tpu.memory_space<vmem>>, vector<8x16xbf16>
    %c0_14 = arith.constant 0 : index
    %c0_15 = arith.constant 0 : index
    %17 = vector.load %arg27[%c0_14, %c0_15] : memref<16x32xbf16, #tpu.memory_space<vmem>>, vector<16x16xbf16>
    %c0_16 = arith.constant 0 : index
    %c0_17 = arith.constant 0 : index
    %18 = vector.load %arg28[%c0_16, %c0_17] : memref<16x32xbf16, #tpu.memory_space<vmem>>, vector<16x16xbf16>
    %cst_18 = arith.constant dense<0.000000e+00> : vector<8x16xf32>
    %19 = tpu.matmul %16, %17, %cst_18 {dimension_numbers = #tpu.dot_dimension_numbers<[1], [1], [0], [0], [0, 0, 1, 0], [], []>} : vector<8x16xbf16>, vector<16x16xbf16>, vector<8x16xf32> -> vector<8x16xf32>
    %cst_19 = arith.constant 2.500000e-01 : f32
    %20 = vector.broadcast %cst_19 : f32 to vector<8x16xf32>
    %21 = arith.mulf %19, %20 : vector<8x16xf32>
    %cst_20 = arith.constant dense<0xFF800000> : vector<8xf32>
    %22 = vector.multi_reduction <maximumf>, %21, %cst_20 [1] : vector<8x16xf32> to vector<8xf32>
    %23 = vector.shape_cast %22 : vector<8xf32> to vector<8x1xf32>
    %24 = vector.broadcast %23 : vector<8x1xf32> to vector<8x16xf32>
    %25 = arith.subf %21, %24 : vector<8x16xf32>
    %26 = math.exp %25 : vector<8x16xf32>
    %cst_21 = arith.constant dense<0.000000e+00> : vector<8xf32>
    %27 = vector.multi_reduction <add>, %26, %cst_21 [1] : vector<8x16xf32> to vector<8xf32>
    %28 = vector.shape_cast %27 : vector<8xf32> to vector<8x1xf32>
    %29 = tpu.reciprocal %28 {approx = true} : vector<8x1xf32> -> vector<8x1xf32>
    %30 = vector.broadcast %29 : vector<8x1xf32> to vector<8x16xf32>
    %31 = arith.mulf %26, %30 : vector<8x16xf32>
    %32 = arith.truncf %31 : vector<8x16xf32> to vector<8x16xbf16>
    %cst_22 = arith.constant dense<0.000000e+00> : vector<8x16xf32>
    %33 = tpu.matmul %32, %18, %cst_22 {dimension_numbers = #tpu.dot_dimension_numbers<[1], [0], [0], [1], [0, 0, 1, 1], [], []>} : vector<8x16xbf16>, vector<16x16xbf16>, vector<8x16xf32> -> vector<8x16xf32>
    %34 = arith.truncf %33 : vector<8x16xf32> to vector<8x16xbf16>
    %c0_23 = arith.constant 0 : index
    %c0_24 = arith.constant 0 : index
    %35 = vector.load %arg29[%c0_23, %c0_24] : memref<8x32xbf16, #tpu.memory_space<vmem>>, vector<8x16xbf16>
    tpu.vector_store %arg29[%c0_23, %c0_24], %34 {strides = array<i32>} : memref<8x32xbf16, #tpu.memory_space<vmem>>, vector<8x16xbf16>,
    %c0_25 = arith.constant 0 : index
    %c16 = arith.constant 16 : index
    %36 = vector.load %arg26[%c0_25, %c16] : memref<8x32xbf16, #tpu.memory_space<vmem>>, vector<8x16xbf16>
    %c0_26 = arith.constant 0 : index
    %c16_27 = arith.constant 16 : index
    %37 = vector.load %arg27[%c0_26, %c16_27] : memref<16x32xbf16, #tpu.memory_space<vmem>>, vector<16x16xbf16>
    %c0_28 = arith.constant 0 : index
    %c16_29 = arith.constant 16 : index
    %38 = vector.load %arg28[%c0_28, %c16_29] : memref<16x32xbf16, #tpu.memory_space<vmem>>, vector<16x16xbf16>
    %cst_30 = arith.constant dense<0.000000e+00> : vector<8x16xf32>
    %39 = tpu.matmul %36, %37, %cst_30 {dimension_numbers = #tpu.dot_dimension_numbers<[1], [1], [0], [0], [0, 0, 1, 0], [], []>} : vector<8x16xbf16>, vector<16x16xbf16>, vector<8x16xf32> -> vector<8x16xf32>
    %cst_31 = arith.constant 2.500000e-01 : f32
    %40 = vector.broadcast %cst_31 : f32 to vector<8x16xf32>
    %41 = arith.mulf %39, %40 : vector<8x16xf32>
    %cst_32 = arith.constant dense<0xFF800000> : vector<8xf32>
    %42 = vector.multi_reduction <maximumf>, %41, %cst_32 [1] : vector<8x16xf32> to vector<8xf32>
    %43 = vector.shape_cast %42 : vector<8xf32> to vector<8x1xf32>
    %44 = vector.broadcast %43 : vector<8x1xf32> to vector<8x16xf32>
    %45 = arith.subf %41, %44 : vector<8x16xf32>
    %46 = math.exp %45 : vector<8x16xf32>
    %cst_33 = arith.constant dense<0.000000e+00> : vector<8xf32>
    %47 = vector.multi_reduction <add>, %46, %cst_33 [1] : vector<8x16xf32> to vector<8xf32>
    %48 = vector.shape_cast %47 : vector<8xf32> to vector<8x1xf32>
    %49 = tpu.reciprocal %48 {approx = true} : vector<8x1xf32> -> vector<8x1xf32>
    %50 = vector.broadcast %49 : vector<8x1xf32> to vector<8x16xf32>
    %51 = arith.mulf %46, %50 : vector<8x16xf32>
    %52 = arith.truncf %51 : vector<8x16xf32> to vector<8x16xbf16>
    %cst_34 = arith.constant dense<0.000000e+00> : vector<8x16xf32>
    %53 = tpu.matmul %52, %38, %cst_34 {dimension_numbers = #tpu.dot_dimension_numbers<[1], [0], [0], [1], [0, 0, 1, 1], [], []>} : vector<8x16xbf16>, vector<16x16xbf16>, vector<8x16xf32> -> vector<8x16xf32>
    %54 = arith.truncf %53 : vector<8x16xf32> to vector<8x16xbf16>
    %c0_35 = arith.constant 0 : index
    %c16_36 = arith.constant 16 : index
    %55 = vector.load %arg29[%c0_35, %c16_36] : memref<8x32xbf16, #tpu.memory_space<vmem>>, vector<8x16xbf16>
    tpu.vector_store %arg29[%c0_35, %c16_36], %54 {strides = array<i32>} : memref<8x32xbf16, #tpu.memory_space<vmem>>, vector<8x16xbf16>,
    %c0_37 = arith.constant 0 : index
    %c0_38 = arith.constant 0 : index
    %56 = vector.load %arg29[%c0_37, %c0_38] : memref<8x32xbf16, #tpu.memory_space<vmem>>, vector<8x32xbf16>
    %c0_39 = arith.constant 0 : index
    %c0_40 = arith.constant 0 : index
    %57 = vector.load %arg15[%c0_39, %c0_40] : memref<32x32xbf16, #tpu.memory_space<vmem>>, vector<32x32xbf16>
    %cst_41 = arith.constant dense<0.000000e+00> : vector<8x32xf32>
    %58 = tpu.matmul %56, %57, %cst_41 {dimension_numbers = #tpu.dot_dimension_numbers<[1], [0], [0], [1], [0, 0, 1, 1], [], []>} : vector<8x32xbf16>, vector<32x32xbf16>, vector<8x32xf32> -> vector<8x32xf32>
    %c0_42 = arith.constant 0 : index
    %c0_43 = arith.constant 0 : index
    %59 = vector.load %arg16[%c0_42, %c0_43] : memref<1x32xf32, #tpu.memory_space<vmem>>, vector<1x32xf32>
    %60 = vector.broadcast %59 : vector<1x32xf32> to vector<8x32xf32>
    %61 = arith.addf %58, %60 : vector<8x32xf32>
    %62 = arith.addf %61, %4 : vector<8x32xf32>
    %c0_44 = arith.constant 0 : index
    %c0_45 = arith.constant 0 : index
    %63 = vector.load %arg17[%c0_44, %c0_45] : memref<1x32xf32, #tpu.memory_space<vmem>>, vector<1x32xf32>
    %c0_46 = arith.constant 0 : index
    %c0_47 = arith.constant 0 : index
    %64 = vector.load %arg18[%c0_46, %c0_47] : memref<1x32xf32, #tpu.memory_space<vmem>>, vector<1x32xf32>
    %cst_48 = arith.constant dense<0.000000e+00> : vector<8xf32>
    %65 = vector.multi_reduction <add>, %62, %cst_48 [1] : vector<8x32xf32> to vector<8xf32>
    %66 = vector.shape_cast %65 : vector<8xf32> to vector<8x1xf32>
    %cst_49 = arith.constant 3.200000e+01 : f32
    %67 = vector.broadcast %cst_49 : f32 to vector<8x1xf32>
    %68 = arith.divf %66, %67 : vector<8x1xf32>
    %69 = vector.broadcast %68 : vector<8x1xf32> to vector<8x32xf32>
    %70 = arith.subf %62, %69 : vector<8x32xf32>
    %71 = arith.mulf %70, %70 : vector<8x32xf32>
    %cst_50 = arith.constant dense<0.000000e+00> : vector<8xf32>
    %72 = vector.multi_reduction <add>, %71, %cst_50 [1] : vector<8x32xf32> to vector<8xf32>
    %73 = vector.shape_cast %72 : vector<8xf32> to vector<8x1xf32>
    %cst_51 = arith.constant 3.200000e+01 : f32
    %74 = vector.broadcast %cst_51 : f32 to vector<8x1xf32>
    %75 = arith.divf %73, %74 : vector<8x1xf32>
    %cst_52 = arith.constant 9.99999974E-6 : f32
    %76 = vector.broadcast %cst_52 : f32 to vector<8x1xf32>
    %77 = arith.addf %75, %76 : vector<8x1xf32>
    %78 = math.rsqrt %77 : vector<8x1xf32>
    %79 = vector.broadcast %78 : vector<8x1xf32> to vector<8x32xf32>
    %80 = arith.mulf %70, %79 : vector<8x32xf32>
    %81 = vector.broadcast %63 : vector<1x32xf32> to vector<8x32xf32>
    %82 = arith.mulf %80, %81 : vector<8x32xf32>
    %83 = vector.broadcast %64 : vector<1x32xf32> to vector<8x32xf32>
    %84 = arith.addf %82, %83 : vector<8x32xf32>
    %85 = arith.truncf %84 : vector<8x32xf32> to vector<8x32xbf16>
    %c0_53 = arith.constant 0 : index
    %c0_54 = arith.constant 0 : index
    %86 = vector.load %arg19[%c0_53, %c0_54] : memref<32x64xbf16, #tpu.memory_space<vmem>>, vector<32x64xbf16>
    %cst_55 = arith.constant dense<0.000000e+00> : vector<8x64xf32>
    %87 = tpu.matmul %85, %86, %cst_55 {dimension_numbers = #tpu.dot_dimension_numbers<[1], [0], [0], [1], [0, 0, 1, 1], [], []>} : vector<8x32xbf16>, vector<32x64xbf16>, vector<8x64xf32> -> vector<8x64xf32>
    %c0_56 = arith.constant 0 : index
    %c0_57 = arith.constant 0 : index
    %88 = vector.load %arg20[%c0_56, %c0_57] : memref<1x64xf32, #tpu.memory_space<vmem>>, vector<1x64xf32>
    %89 = vector.broadcast %88 : vector<1x64xf32> to vector<8x64xf32>
    %90 = arith.addf %87, %89 : vector<8x64xf32>
    %cst_58 = arith.constant 5.000000e-01 : f32
    %91 = vector.broadcast %cst_58 : f32 to vector<8x64xf32>
    %92 = arith.mulf %91, %90 : vector<8x64xf32>
    %cst_59 = arith.constant 0.707106769 : f32
    %93 = vector.broadcast %cst_59 : f32 to vector<8x64xf32>
    %94 = arith.mulf %90, %93 : vector<8x64xf32>
    %95 = math.absf %94 : vector<8x64xf32>
    %cst_60 = arith.constant 0.327591091 : f32
    %96 = vector.broadcast %cst_60 : f32 to vector<8x64xf32>
    %97 = arith.mulf %96, %95 : vector<8x64xf32>
    %cst_61 = arith.constant 1.000000e+00 : f32
    %98 = vector.broadcast %cst_61 : f32 to vector<8x64xf32>
    %99 = arith.addf %98, %97 : vector<8x64xf32>
    %cst_62 = arith.constant 1.000000e+00 : f32
    %100 = vector.broadcast %cst_62 : f32 to vector<8x64xf32>
    %101 = arith.divf %100, %99 : vector<8x64xf32>
    %cst_63 = arith.constant 1.06140542 : f32
    %102 = vector.broadcast %cst_63 : f32 to vector<8x64xf32>
    %103 = arith.mulf %102, %101 : vector<8x64xf32>
    %cst_64 = arith.constant -1.45315206 : f32
    %104 = vector.broadcast %cst_64 : f32 to vector<8x64xf32>
    %105 = arith.addf %103, %104 : vector<8x64xf32>
    %106 = arith.mulf %105, %101 : vector<8x64xf32>
    %cst_65 = arith.constant 1.42141378 : f32
    %107 = vector.broadcast %cst_65 : f32 to vector<8x64xf32>
    %108 = arith.addf %106, %107 : vector<8x64xf32>
    %109 = arith.mulf %108, %101 : vector<8x64xf32>
    %cst_66 = arith.constant -0.284496725 : f32
    %110 = vector.broadcast %cst_66 : f32 to vector<8x64xf32>
    %111 = arith.addf %109, %110 : vector<8x64xf32>
    %112 = arith.mulf %111, %101 : vector<8x64xf32>
    %cst_67 = arith.constant 0.254829586 : f32
    %113 = vector.broadcast %cst_67 : f32 to vector<8x64xf32>
    %114 = arith.addf %112, %113 : vector<8x64xf32>
    %115 = arith.mulf %114, %101 : vector<8x64xf32>
    %cst_68 = arith.constant 0.000000e+00 : f32
    %116 = vector.broadcast %cst_68 : f32 to vector<8x64xf32>
    %117 = arith.subf %116, %95 : vector<8x64xf32>
    %118 = arith.mulf %117, %95 : vector<8x64xf32>
    %119 = math.exp %118 : vector<8x64xf32>
    %120 = arith.mulf %115, %119 : vector<8x64xf32>
    %cst_69 = arith.constant 1.000000e+00 : f32
    %121 = vector.broadcast %cst_69 : f32 to vector<8x64xf32>
    %122 = arith.subf %121, %120 : vector<8x64xf32>
    %cst_70 = arith.constant 0.000000e+00 : f32
    %123 = vector.broadcast %cst_70 : f32 to vector<8x64xf32>
    %124 = arith.cmpf oge, %94, %123 : vector<8x64xf32>
    %cst_71 = arith.constant 0.000000e+00 : f32
    %125 = vector.broadcast %cst_71 : f32 to vector<8x64xf32>
    %126 = arith.subf %125, %122 : vector<8x64xf32>
    %127 = arith.select %124, %122, %126 : vector<8x64xi1>, vector<8x64xf32>
    %cst_72 = arith.constant 1.000000e+00 : f32
    %128 = vector.broadcast %cst_72 : f32 to vector<8x64xf32>
    %129 = arith.addf %128, %127 : vector<8x64xf32>
    %130 = arith.mulf %92, %129 : vector<8x64xf32>
    %131 = arith.truncf %130 : vector<8x64xf32> to vector<8x64xbf16>
    %c0_73 = arith.constant 0 : index
    %c0_74 = arith.constant 0 : index
    %132 = vector.load %arg21[%c0_73, %c0_74] : memref<64x32xbf16, #tpu.memory_space<vmem>>, vector<64x32xbf16>
    %cst_75 = arith.constant dense<0.000000e+00> : vector<8x32xf32>
    %133 = tpu.matmul %131, %132, %cst_75 {dimension_numbers = #tpu.dot_dimension_numbers<[1], [0], [0], [1], [0, 0, 1, 1], [], []>} : vector<8x64xbf16>, vector<64x32xbf16>, vector<8x32xf32> -> vector<8x32xf32>
    %c0_76 = arith.constant 0 : index
    %c0_77 = arith.constant 0 : index
    %134 = vector.load %arg22[%c0_76, %c0_77] : memref<1x32xf32, #tpu.memory_space<vmem>>, vector<1x32xf32>
    %135 = vector.broadcast %134 : vector<1x32xf32> to vector<8x32xf32>
    %136 = arith.addf %133, %135 : vector<8x32xf32>
    %137 = arith.addf %136, %84 : vector<8x32xf32>
    %c0_78 = arith.constant 0 : index
    %c0_79 = arith.constant 0 : index
    %138 = vector.load %arg23[%c0_78, %c0_79] : memref<1x32xf32, #tpu.memory_space<vmem>>, vector<1x32xf32>
    %c0_80 = arith.constant 0 : index
    %c0_81 = arith.constant 0 : index
    %139 = vector.load %arg24[%c0_80, %c0_81] : memref<1x32xf32, #tpu.memory_space<vmem>>, vector<1x32xf32>
    %cst_82 = arith.constant dense<0.000000e+00> : vector<8xf32>
    %140 = vector.multi_reduction <add>, %137, %cst_82 [1] : vector<8x32xf32> to vector<8xf32>
    %141 = vector.shape_cast %140 : vector<8xf32> to vector<8x1xf32>
    %cst_83 = arith.constant 3.200000e+01 : f32
    %142 = vector.broadcast %cst_83 : f32 to vector<8x1xf32>
    %143 = arith.divf %141, %142 : vector<8x1xf32>
    %144 = vector.broadcast %143 : vector<8x1xf32> to vector<8x32xf32>
    %145 = arith.subf %137, %144 : vector<8x32xf32>
    %146 = arith.mulf %145, %145 : vector<8x32xf32>
    %cst_84 = arith.constant dense<0.000000e+00> : vector<8xf32>
    %147 = vector.multi_reduction <add>, %146, %cst_84 [1] : vector<8x32xf32> to vector<8xf32>
    %148 = vector.shape_cast %147 : vector<8xf32> to vector<8x1xf32>
    %cst_85 = arith.constant 3.200000e+01 : f32
    %149 = vector.broadcast %cst_85 : f32 to vector<8x1xf32>
    %150 = arith.divf %148, %149 : vector<8x1xf32>
    %cst_86 = arith.constant 9.99999974E-6 : f32
    %151 = vector.broadcast %cst_86 : f32 to vector<8x1xf32>
    %152 = arith.addf %150, %151 : vector<8x1xf32>
    %153 = math.rsqrt %152 : vector<8x1xf32>
    %154 = vector.broadcast %153 : vector<8x1xf32> to vector<8x32xf32>
    %155 = arith.mulf %145, %154 : vector<8x32xf32>
    %156 = vector.broadcast %138 : vector<1x32xf32> to vector<8x32xf32>
    %157 = arith.mulf %155, %156 : vector<8x32xf32>
    %158 = vector.broadcast %139 : vector<1x32xf32> to vector<8x32xf32>
    %159 = arith.addf %157, %158 : vector<8x32xf32>
    %c0_87 = arith.constant 0 : index
    %c0_88 = arith.constant 0 : index
    %c0_89 = arith.constant 0 : index
    %160 = vector.load %arg25[%c0_87, %c0_88, %c0_89] : memref<1x8x32xf32, #tpu.memory_space<vmem>>, vector<1x8x32xf32>
    %161 = vector.shape_cast %160 : vector<1x8x32xf32> to vector<8x32xf32>
    %162 = vector.shape_cast %159 : vector<8x32xf32> to vector<1x8x32xf32>
    tpu.vector_store %arg25[%c0_87, %c0_88, %c0_89], %162 {strides = array<i32>} : memref<1x8x32xf32, #tpu.memory_space<vmem>>, vector<1x8x32xf32>,
    return
  }
  func.func @transform_0(%arg0: i32, %arg1: i32) -> (i32, i32, i32) {
    %c0_i32 = arith.constant 0 : i32
    %c0_i32_0 = arith.constant 0 : i32
    %c0_i32_1 = arith.constant 0 : i32
    return %arg0, %c0_i32, %c0_i32_0 : i32, i32, i32
  }
  func.func @transform_1(%arg0: i32, %arg1: i32) -> (i32, i32, i32) {
    %c0_i32 = arith.constant 0 : i32
    %c0_i32_0 = arith.constant 0 : i32
    return %arg0, %arg1, %c0_i32 : i32, i32, i32
  }
  func.func @transform_2(%arg0: i32, %arg1: i32) -> (i32, i32) {
    %c0_i32 = arith.constant 0 : i32
    %c0_i32_0 = arith.constant 0 : i32
    %c0_i32_1 = arith.constant 0 : i32
    return %c0_i32, %c0_i32_0 : i32, i32
  }
  func.func @transform_3(%arg0: i32, %arg1: i32) -> (i32, i32) {
    %c0_i32 = arith.constant 0 : i32
    %c0_i32_0 = arith.constant 0 : i32
    %c0_i32_1 = arith.constant 0 : i32
    return %c0_i32, %c0_i32_0 : i32, i32
  }
  func.func @transform_4(%arg0: i32, %arg1: i32) -> (i32, i32) {
    %c0_i32 = arith.constant 0 : i32
    %c0_i32_0 = arith.constant 0 : i32
    %c0_i32_1 = arith.constant 0 : i32
    return %c0_i32, %c0_i32_0 : i32, i32
  }
  func.func @transform_5(%arg0: i32, %arg1: i32) -> (i32, i32) {
    %c0_i32 = arith.constant 0 : i32
    %c0_i32_0 = arith.constant 0 : i32
    %c0_i32_1 = arith.constant 0 : i32
    return %c0_i32, %c0_i32_0 : i32, i32
  }
  func.func @transform_6(%arg0: i32, %arg1: i32) -> (i32, i32) {
    %c0_i32 = arith.constant 0 : i32
    %c0_i32_0 = arith.constant 0 : i32
    %c0_i32_1 = arith.constant 0 : i32
    return %c0_i32, %c0_i32_0 : i32, i32
  }
  func.func @transform_7(%arg0: i32, %arg1: i32) -> (i32, i32) {
    %c0_i32 = arith.constant 0 : i32
    %c0_i32_0 = arith.constant 0 : i32
    %c0_i32_1 = arith.constant 0 : i32
    return %c0_i32, %c0_i32_0 : i32, i32
  }
  func.func @transform_8(%arg0: i32, %arg1: i32) -> (i32, i32) {
    %c0_i32 = arith.constant 0 : i32
    %c0_i32_0 = arith.constant 0 : i32
    %c0_i32_1 = arith.constant 0 : i32
    return %c0_i32, %c0_i32_0 : i32, i32
  }
  func.func @transform_9(%arg0: i32, %arg1: i32) -> (i32, i32) {
    %c0_i32 = arith.constant 0 : i32
    %c0_i32_0 = arith.constant 0 : i32
    %c0_i32_1 = arith.constant 0 : i32
    return %c0_i32, %c0_i32_0 : i32, i32
  }
  func.func @transform_10(%arg0: i32, %arg1: i32) -> (i32, i32) {
    %c0_i32 = arith.constant 0 : i32
    %c0_i32_0 = arith.constant 0 : i32
    %c0_i32_1 = arith.constant 0 : i32
    return %c0_i32, %c0_i32_0 : i32, i32
  }
  func.func @transform_11(%arg0: i32, %arg1: i32) -> (i32, i32) {
    %c0_i32 = arith.constant 0 : i32
    %c0_i32_0 = arith.constant 0 : i32
    %c0_i32_1 = arith.constant 0 : i32
    return %c0_i32, %c0_i32_0 : i32, i32
  }
  func.func @transform_12(%arg0: i32, %arg1: i32) -> (i32, i32) {
    %c0_i32 = arith.constant 0 : i32
    %c0_i32_0 = arith.constant 0 : i32
    %c0_i32_1 = arith.constant 0 : i32
    return %c0_i32, %c0_i32_0 : i32, i32
  }
  func.func @transform_13(%arg0: i32, %arg1: i32) -> (i32, i32) {
    %c0_i32 = arith.constant 0 : i32
    %c0_i32_0 = arith.constant 0 : i32
    %c0_i32_1 = arith.constant 0 : i32
    return %c0_i32, %c0_i32_0 : i32, i32
  }
  func.func @transform_14(%arg0: i32, %arg1: i32) -> (i32, i32) {
    %c0_i32 = arith.constant 0 : i32
    %c0_i32_0 = arith.constant 0 : i32
    %c0_i32_1 = arith.constant 0 : i32
    return %c0_i32, %c0_i32_0 : i32, i32
  }
  func.func @transform_15(%arg0: i32, %arg1: i32) -> (i32, i32) {
    %c0_i32 = arith.constant 0 : i32
    %c0_i32_0 = arith.constant 0 : i32
    %c0_i32_1 = arith.constant 0 : i32
    return %c0_i32, %c0_i32_0 : i32, i32
  }
  func.func @transform_16(%arg0: i32, %arg1: i32) -> (i32, i32) {
    %c0_i32 = arith.constant 0 : i32
    %c0_i32_0 = arith.constant 0 : i32
    %c0_i32_1 = arith.constant 0 : i32
    return %c0_i32, %c0_i32_0 : i32, i32
  }
  func.func @transform_17(%arg0: i32, %arg1: i32) -> (i32, i32) {
    %c0_i32 = arith.constant 0 : i32
    %c0_i32_0 = arith.constant 0 : i32
    %c0_i32_1 = arith.constant 0 : i32
    return %c0_i32, %c0_i32_0 : i32, i32
  }
  func.func @transform_18(%arg0: i32, %arg1: i32) -> (i32, i32) {
    %c0_i32 = arith.constant 0 : i32
    %c0_i32_0 = arith.constant 0 : i32
    %c0_i32_1 = arith.constant 0 : i32
    return %c0_i32, %c0_i32_0 : i32, i32
  }
  func.func @transform_19(%arg0: i32, %arg1: i32) -> (i32, i32) {
    %c0_i32 = arith.constant 0 : i32
    %c0_i32_0 = arith.constant 0 : i32
    %c0_i32_1 = arith.constant 0 : i32
    return %c0_i32, %c0_i32_0 : i32, i32
  }
  func.func @transform_20(%arg0: i32, %arg1: i32) -> (i32, i32) {
    %c0_i32 = arith.constant 0 : i32
    %c0_i32_0 = arith.constant 0 : i32
    %c0_i32_1 = arith.constant 0 : i32
    return %c0_i32, %c0_i32_0 : i32, i32
  }
  func.func @transform_21(%arg0: i32, %arg1: i32) -> (i32, i32) {
    %c0_i32 = arith.constant 0 : i32
    %c0_i32_0 = arith.constant 0 : i32
    %c0_i32_1 = arith.constant 0 : i32
    return %c0_i32, %c0_i32_0 : i32, i32
  }
  func.func @transform_22(%arg0: i32, %arg1: i32) -> (i32, i32) {
    %c0_i32 = arith.constant 0 : i32
    %c0_i32_0 = arith.constant 0 : i32
    %c0_i32_1 = arith.constant 0 : i32
    return %c0_i32, %c0_i32_0 : i32, i32
  }
  func.func @transform_23(%arg0: i32, %arg1: i32) -> (i32, i32, i32) {
    %c0_i32 = arith.constant 0 : i32
    %c0_i32_0 = arith.constant 0 : i32
    return %arg0, %arg1, %c0_i32 : i32, i32, i32
  }
}

</mosaic_0001>

<llo_original>
// kernel: linformer_forward.2
$region0: #{linformer_forward.2}
  #allocation0 [shape = 'u32[]', space=smem, size = 0x4, offset = 0x4, fixed_abs, tag = 'smem constant byte address 0x4 - core index']
  #allocation1 [shape = 'u32[144,128]{1,0:T(1,128)}', space=vmem, size = 0x12000, scoped, tag = 'internal scratch']
  #allocation2 [shape = 'bf16[8,32]{1,0:T(8,128)(2,1)}', space=vmem, size = 0x800, scoped, tag = 'scratch operand']
  #allocation3 [shape = 'bf16[16,32]{1,0:T(16,128)(2,1)}', space=vmem, size = 0x1000, scoped, tag = 'scratch operand']
  #allocation4 [shape = 'bf16[16,32]{1,0:T(16,128)(2,1)}', space=vmem, size = 0x1000, scoped, tag = 'scratch operand']
  #allocation5 [shape = 'bf16[8,32]{1,0:T(8,128)(2,1)}', space=vmem, size = 0x800, scoped, tag = 'scratch operand']
  %s0 = inlined_call_operand.hbm [shape: f32[2,8,32], index: 0, kind: input, shape index: {}, may-alias: {0,1}]
  %s1 = inlined_call_operand.hbm [shape: f32[2,8,32], index: 1, kind: input, shape index: {}, may-alias: {0,1}]
  %s2 = inlined_call_operand.hbm [shape: bf16[32,16], index: 2, kind: input, shape index: {}]
  %s3 = inlined_call_operand.hbm [shape: bf16[32,16], index: 3, kind: input, shape index: {}]
  %s4 = inlined_call_operand.hbm [shape: bf16[32,16], index: 4, kind: input, shape index: {}]
  %s5 = inlined_call_operand.hbm [shape: bf16[16,32], index: 5, kind: input, shape index: {}]
  %s6 = inlined_call_operand.hbm [shape: f32[1,32], index: 6, kind: input, shape index: {}]
  %s7 = inlined_call_operand.hbm [shape: bf16[16,32], index: 7, kind: input, shape index: {}]
  %s8 = inlined_call_operand.hbm [shape: f32[1,32], index: 8, kind: input, shape index: {}]
  %s9 = inlined_call_operand.hbm [shape: bf16[16,32], index: 9, kind: input, shape index: {}]
  %s10 = inlined_call_operand.hbm [shape: f32[1,32], index: 10, kind: input, shape index: {}]
  %s11 = inlined_call_operand.hbm [shape: bf16[16,8], index: 11, kind: input, shape index: {}]
  %s12 = inlined_call_operand.hbm [shape: f32[16,1], index: 12, kind: input, shape index: {}]
  %s13 = inlined_call_operand.hbm [shape: bf16[32,32], index: 13, kind: input, shape index: {}]
  %s14 = inlined_call_operand.hbm [shape: f32[1,32], index: 14, kind: input, shape index: {}]
  %s15 = inlined_call_operand.hbm [shape: f32[1,32], index: 15, kind: input, shape index: {}]
  %s16 = inlined_call_operand.hbm [shape: f32[1,32], index: 16, kind: input, shape index: {}]
  %s17 = inlined_call_operand.hbm [shape: bf16[32,64], index: 17, kind: input, shape index: {}]
  %s18 = inlined_call_operand.hbm [shape: f32[1,64], index: 18, kind: input, shape index: {}]
  %s19 = inlined_call_operand.hbm [shape: bf16[64,32], index: 19, kind: input, shape index: {}]
  %s20 = inlined_call_operand.hbm [shape: f32[1,32], index: 20, kind: input, shape index: {}]
  %s21 = inlined_call_operand.hbm [shape: f32[1,32], index: 21, kind: input, shape index: {}]
  %s22 = inlined_call_operand.hbm [shape: f32[1,32], index: 22, kind: input, shape index: {}]
  %s23 = inlined_call_operand.hbm [shape: f32[2,8,32], index: 23, kind: output, shape index: {}]
  %s24 = sld [smem:[#allocation0]]
  $region221: #{linformer_forward.2} parent=0
    _
  %s26 = ssub.s32 1, %s24
  %s27 = scalar_select 0, %s26, %s24
  $region1: #{linformer_forward.2} parent=0
    #allocation6 [shape = 'u8[8192]{0}', space=vmem, size = 0x2000, scoped, tag = 'input window, operand 0']
    #allocation7 [shape = 's32[2]{0}', space=sflag, size = 0x8, scoped, tag = 'scoped memory for linformer_forward.2']
    #allocation8 [shape = 's32[2]{0}', space=sflag, size = 0x8, scoped, tag = 'scoped memory for linformer_forward.2']
    #allocation9 [shape = 'u8[8192]{0}', space=vmem, size = 0x2000, scoped, tag = 'input window, operand 1']
    #allocation10 [shape = 's32[2]{0}', space=sflag, size = 0x8, scoped, tag = 'scoped memory for linformer_forward.2']
    #allocation11 [shape = 'u8[8192]{0}', space=vmem, size = 0x2000, scoped, tag = 'input window, operand 2, single buffered']
    #allocation12 [shape = 'u8[8192]{0}', space=vmem, size = 0x2000, scoped, tag = 'input window, operand 3, single buffered']
    #allocation13 [shape = 's32[1]{0}', space=sflag, size = 0x4, scoped, tag = 'scoped memory for linformer_forward.2']
    #allocation14 [shape = 'u8[8192]{0}', space=vmem, size = 0x2000, scoped, tag = 'input window, operand 4, single buffered']
    #allocation15 [shape = 'u8[4096]{0}', space=vmem, size = 0x1000, scoped, tag = 'input window, operand 5, single buffered']
    #allocation16 [shape = 's32[1]{0}', space=sflag, size = 0x4, scoped, tag = 'scoped memory for linformer_forward.2']
    #allocation17 [shape = 'u8[512]{0}', space=vmem, size = 0x400, scoped, tag = 'input window, operand 6, single buffered']
    #allocation18 [shape = 'u8[4096]{0}', space=vmem, size = 0x1000, scoped, tag = 'input window, operand 7, single buffered']
    #allocation19 [shape = 's32[1]{0}', space=sflag, size = 0x4, scoped, tag = 'scoped memory for linformer_forward.2']
    #allocation20 [shape = 'u8[512]{0}', space=vmem, size = 0x400, scoped, tag = 'input window, operand 8, single buffered']
    #allocation21 [shape = 'u8[4096]{0}', space=vmem, size = 0x1000, scoped, tag = 'input window, operand 9, single buffered']
    #allocation22 [shape = 's32[1]{0}', space=sflag, size = 0x4, scoped, tag = 'scoped memory for linformer_forward.2']
    #allocation23 [shape = 'u8[512]{0}', space=vmem, size = 0x400, scoped, tag = 'input window, operand 10, single buffered']
    #allocation24 [shape = 'u8[4096]{0}', space=vmem, size = 0x1000, scoped, tag = 'input window, operand 11, single buffered']
    #allocation25 [shape = 's32[1]{0}', space=sflag, size = 0x4, scoped, tag = 'scoped memory for linformer_forward.2']
    #allocation26 [shape = 'u8[8192]{0}', space=vmem, size = 0x2000, scoped, tag = 'input window, operand 12, single buffered']
    #allocation27 [shape = 'u8[8192]{0}', space=vmem, size = 0x2000, scoped, tag = 'input window, operand 13, single buffered']
    #allocation28 [shape = 's32[1]{0}', space=sflag, size = 0x4, scoped, tag = 'scoped memory for linformer_forward.2']
    #allocation29 [shape = 'u8[512]{0}', space=vmem, size = 0x400, scoped, tag = 'input window, operand 14, single buffered']
    #allocation30 [shape = 'u8[512]{0}', space=vmem, size = 0x400, scoped, tag = 'input window, operand 15, single buffered']
    #allocation31 [shape = 's32[1]{0}', space=sflag, size = 0x4, scoped, tag = 'scoped memory for linformer_forward.2']
    #allocation32 [shape = 'u8[512]{0}', space=vmem, size = 0x400, scoped, tag = 'input window, operand 16, single buffered']
    #allocation33 [shape = 'u8[8192]{0}', space=vmem, size = 0x2000, scoped, tag = 'input window, operand 17, single buffered']
    #allocation34 [shape = 's32[1]{0}', space=sflag, size = 0x4, scoped, tag = 'scoped memory for linformer_forward.2']
    #allocation35 [shape = 'u8[512]{0}', space=vmem, size = 0x400, scoped, tag = 'input window, operand 18, single buffered']
    #allocation36 [shape = 'u8[16384]{0}', space=vmem, size = 0x4000, scoped, tag = 'input window, operand 19, single buffered']
    #allocation37 [shape = 's32[1]{0}', space=sflag, size = 0x4, scoped, tag = 'scoped memory for linformer_forward.2']
    #allocation38 [shape = 'u8[512]{0}', space=vmem, size = 0x400, scoped, tag = 'input window, operand 20, single buffered']
    #allocation39 [shape = 'u8[512]{0}', space=vmem, size = 0x400, scoped, tag = 'input window, operand 21, single buffered']
    #allocation40 [shape = 's32[1]{0}', space=sflag, size = 0x4, scoped, tag = 'scoped memory for linformer_forward.2']
    #allocation41 [shape = 'u8[512]{0}', space=vmem, size = 0x400, scoped, tag = 'input window, operand 22, single buffered']
    #allocation42 [shape = 'u8[8192]{0}', space=vmem, size = 0x2000, scoped, tag = 'output window, operand 0']
    %28 = vsyncpa [#allocation7], 0
    %s29 = scalar_lea.sflag [#allocation7], 1
    %30 = vsyncpa %s29, 0
    %31 = vsyncpa [#allocation10], 0
    %s32 = scalar_lea.sflag [#allocation10], 1
    %33 = vsyncpa %s32, 0
    %34 = vsyncpa [#allocation13], 0
    %35 = vsyncpa [#allocation16], 0
    %36 = vsyncpa [#allocation19], 0
    %37 = vsyncpa [#allocation22], 0
    %38 = vsyncpa [#allocation25], 0
    %39 = vsyncpa [#allocation28], 0
    %40 = vsyncpa [#allocation31], 0
    %41 = vsyncpa [#allocation34], 0
    %42 = vsyncpa [#allocation37], 0
    %43 = vsyncpa [#allocation40], 0
    %44 = vsyncpa [#allocation8], 0
    %s45 = scalar_lea.sflag [#allocation8], 1
    %46 = vsyncpa %s45, 0
    loop: start=0, step=1, limit=4
    $region2: #{linformer_forward.2} parent=1 // loop_pre_header
      _
    $region3: #{linformer_forward.2} parent=1 // loop_header
      %s48 = sphi 0, %s52
      %p49 = scmp.ge.s32.totalorder %s48, 4
      %s55 = sphi 0, %s67
      %s56 = sphi 0, %s63
      %s57 = sphi 0, %s55
      %s58 = sphi 0, %s56
      %s59 = sphi 0, %s57
      %s60 = sphi 0, %s58
      %s70 = sphi 0, %s72
      %s73 = sphi 0, %s70
      %s74 = sphi 0, %s73
      %s90 = sphi 0, %s74
      %s98 = sphi 0, %s100
      %s101 = sphi 0, %s98
      %s102 = sphi 0, %s101
      %s118 = sphi 0, %s102
      %s122 = sphi 0, %s122
      %s124 = sphi 0, %s122
      %s125 = sphi 0, %s124
      %s139 = sphi 0, %s125
      %s143 = sphi 0, %s143
      %s145 = sphi 0, %s143
      %s146 = sphi 0, %s145
      %s160 = sphi 0, %s146
      %s164 = sphi 0, %s164
      %s166 = sphi 0, %s164
      %s167 = sphi 0, %s166
      %s181 = sphi 0, %s167
      %s185 = sphi 0, %s185
      %s187 = sphi 0, %s185
      %s188 = sphi 0, %s187
      %s202 = sphi 0, %s188
      %s206 = sphi 0, %s206
      %s208 = sphi 0, %s206
      %s209 = sphi 0, %s208
      %s223 = sphi 0, %s209
      %s227 = sphi 0, %s227
      %s229 = sphi 0, %s227
      %s230 = sphi 0, %s229
      %s244 = sphi 0, %s230
      %s248 = sphi 0, %s248
      %s250 = sphi 0, %s248
      %s251 = sphi 0, %s250
      %s265 = sphi 0, %s251
      %s269 = sphi 0, %s269
      %s271 = sphi 0, %s269
      %s272 = sphi 0, %s271
      %s286 = sphi 0, %s272
      %s290 = sphi 0, %s290
      %s292 = sphi 0, %s290
      %s293 = sphi 0, %s292
      %s307 = sphi 0, %s293
      %s311 = sphi 0, %s311
      %s313 = sphi 0, %s311
      %s314 = sphi 0, %s313
      %s328 = sphi 0, %s314
      %s332 = sphi 0, %s332
      %s334 = sphi 0, %s332
      %s335 = sphi 0, %s334
      %s349 = sphi 0, %s335
      %s353 = sphi 0, %s353
      %s355 = sphi 0, %s353
      %s356 = sphi 0, %s355
      %s370 = sphi 0, %s356
      %s374 = sphi 0, %s374
      %s376 = sphi 0, %s374
      %s377 = sphi 0, %s376
      %s391 = sphi 0, %s377
      %s395 = sphi 0, %s395
      %s397 = sphi 0, %s395
      %s398 = sphi 0, %s397
      %s412 = sphi 0, %s398
      %s416 = sphi 0, %s416
      %s418 = sphi 0, %s416
      %s419 = sphi 0, %s418
      %s433 = sphi 0, %s419
      %s437 = sphi 0, %s437
      %s439 = sphi 0, %s437
      %s440 = sphi 0, %s439
      %s454 = sphi 0, %s440
      %s458 = sphi 0, %s458
      %s460 = sphi 0, %s458
      %s461 = sphi 0, %s460
      %s475 = sphi 0, %s461
      %s479 = sphi 0, %s479
      %s481 = sphi 0, %s479
      %s482 = sphi 0, %s481
      %s496 = sphi 0, %s482
      %s500 = sphi 0, %s500
      %s502 = sphi 0, %s500
      %s503 = sphi 0, %s502
      %s517 = sphi 0, %s503
      %s521 = sphi 0, %s521
      %s523 = sphi 0, %s521
      %s524 = sphi 0, %s523
      %s538 = sphi 0, %s524
      %s542 = sphi 0, %s542
      %s544 = sphi 0, %s542
      %s545 = sphi 0, %s544
      %s559 = sphi 0, %s545
      %s567 = sphi 0, %s569
      %s570 = sphi 0, %s567
      %s571 = sphi 0, %s570
      %s587 = sphi 0, %s571
    $region4: #{linformer_forward.2} parent=1 // loop_header_branch
      %51 = sbr.rel (%p49) target = $region8
    $region5: #{linformer_forward.2} parent=1 // loop_body
      %s53 = ssub.s32 %s48, 1
      %s54 = ssub.s32 %s48, 2
      %s61 = sadd.s32 1, %s56
      %p62 = scmp.ge.s32.totalorder %s61, 1
      %s63 = scalar_select %p62, 0, %s61
      %s64 = sadd.s32 1, %s55
      %s65 = scalar_select %p62, %s64, %s55
      %p66 = scmp.ge.s32.totalorder %s65, 2
      %s67 = scalar_select %p66, 0, %s65
      %s68 = ssub.s32 %s55, %s67
      %p69 = scmp.eq.s32.totalorder %s68, 0
      %s71 = sadd.s32 %s70, 1
      %s72 = scalar_select %p69, %s70, %s71
      %p75 = pneg %p69
      %p76 = scmp.eq.s32.totalorder %s48, 1
      %p77 = por %p75, %p76
      %p78 = scmp.ne.s32.totalorder %s70, %s73
      %p79 = scmp.eq.s32.totalorder %s48, 0
      %p80 = por %p78, %p79
      %p81 = scmp.ne.s32.totalorder %s70, %s73
      %p82 = scmp.eq.s32.totalorder %s53, 1
      %p83 = por %p81, %p82
      %p84 = scmp.ne.s32.totalorder %s73, %s74
      %p85 = scmp.eq.s32.totalorder %s53, 0
      %p86 = por %p84, %p85
      %p87 = scmp.ne.s32.totalorder %s73, %s74
      %p88 = scmp.eq.s32.totalorder %s54, 1
      %p89 = por %p87, %p88
      %p91 = scmp.ne.s32.totalorder %s74, %s90
      %p92 = scmp.eq.s32.totalorder %s54, 0
      %p93 = por %p91, %p92
      %s94 = ssub.s32 %s55, %s67
      %s95 = ssub.s32 %s56, %s63
      %s96 = sor.u32 %s94, %s95
      %p97 = scmp.eq.s32.totalorder %s96, 0
      %s99 = sadd.s32 %s98, 1
      %s100 = scalar_select %p97, %s98, %s99
      %p103 = pneg %p97
      %p104 = scmp.eq.s32.totalorder %s48, 1
      %p105 = por %p103, %p104
      %p106 = scmp.ne.s32.totalorder %s98, %s101
      %p107 = scmp.eq.s32.totalorder %s48, 0
      %p108 = por %p106, %p107
      %p109 = scmp.ne.s32.totalorder %s98, %s101
      %p110 = scmp.eq.s32.totalorder %s53, 1
      %p111 = por %p109, %p110
      %p112 = scmp.ne.s32.totalorder %s101, %s102
      %p113 = scmp.eq.s32.totalorder %s53, 0
      %p114 = por %p112, %p113
      %p115 = scmp.ne.s32.totalorder %s101, %s102
      %p116 = scmp.eq.s32.totalorder %s54, 1
      %p117 = por %p115, %p116
      %p119 = scmp.ne.s32.totalorder %s102, %s118
      %p120 = scmp.eq.s32.totalorder %s54, 0
      %p121 = por %p119, %p120
      %s123 = sadd.s32 %s122, 1
      %p126 = scmp.eq.s32.totalorder %s48, 1
      %p127 = scmp.ne.s32.totalorder %s122, %s124
      %p128 = scmp.eq.s32.totalorder %s48, 0
      %p129 = por %p127, %p128
      %p130 = scmp.ne.s32.totalorder %s122, %s124
      %p131 = scmp.eq.s32.totalorder %s53, 1
      %p132 = por %p130, %p131
      %p133 = scmp.ne.s32.totalorder %s124, %s125
      %p134 = scmp.eq.s32.totalorder %s53, 0
      %p135 = por %p133, %p134
      %p136 = scmp.ne.s32.totalorder %s124, %s125
      %p137 = scmp.eq.s32.totalorder %s54, 1
      %p138 = por %p136, %p137
      %p140 = scmp.ne.s32.totalorder %s125, %s139
      %p141 = scmp.eq.s32.totalorder %s54, 0
      %p142 = por %p140, %p141
      %s144 = sadd.s32 %s143, 1
      %p147 = scmp.eq.s32.totalorder %s48, 1
      %p148 = scmp.ne.s32.totalorder %s143, %s145
      %p149 = scmp.eq.s32.totalorder %s48, 0
      %p150 = por %p148, %p149
      %p151 = scmp.ne.s32.totalorder %s143, %s145
      %p152 = scmp.eq.s32.totalorder %s53, 1
      %p153 = por %p151, %p152
      %p154 = scmp.ne.s32.totalorder %s145, %s146
      %p155 = scmp.eq.s32.totalorder %s53, 0
      %p156 = por %p154, %p155
      %p157 = scmp.ne.s32.totalorder %s145, %s146
      %p158 = scmp.eq.s32.totalorder %s54, 1
      %p159 = por %p157, %p158
      %p161 = scmp.ne.s32.totalorder %s146, %s160
      %p162 = scmp.eq.s32.totalorder %s54, 0
      %p163 = por %p161, %p162
      %s165 = sadd.s32 %s164, 1
      %p168 = scmp.eq.s32.totalorder %s48, 1
      %p169 = scmp.ne.s32.totalorder %s164, %s166
      %p170 = scmp.eq.s32.totalorder %s48, 0
      %p171 = por %p169, %p170
      %p172 = scmp.ne.s32.totalorder %s164, %s166
      %p173 = scmp.eq.s32.totalorder %s53, 1
      %p174 = por %p172, %p173
      %p175 = scmp.ne.s32.totalorder %s166, %s167
      %p176 = scmp.eq.s32.totalorder %s53, 0
      %p177 = por %p175, %p176
      %p178 = scmp.ne.s32.totalorder %s166, %s167
      %p179 = scmp.eq.s32.totalorder %s54, 1
      %p180 = por %p178, %p179
      %p182 = scmp.ne.s32.totalorder %s167, %s181
      %p183 = scmp.eq.s32.totalorder %s54, 0
      %p184 = por %p182, %p183
      %s186 = sadd.s32 %s185, 1
      %p189 = scmp.eq.s32.totalorder %s48, 1
      %p190 = scmp.ne.s32.totalorder %s185, %s187
      %p191 = scmp.eq.s32.totalorder %s48, 0
      %p192 = por %p190, %p191
      %p193 = scmp.ne.s32.totalorder %s185, %s187
      %p194 = scmp.eq.s32.totalorder %s53, 1
      %p195 = por %p193, %p194
      %p196 = scmp.ne.s32.totalorder %s187, %s188
      %p197 = scmp.eq.s32.totalorder %s53, 0
      %p198 = por %p196, %p197
      %p199 = scmp.ne.s32.totalorder %s187, %s188
      %p200 = scmp.eq.s32.totalorder %s54, 1
      %p201 = por %p199, %p200
      %p203 = scmp.ne.s32.totalorder %s188, %s202
      %p204 = scmp.eq.s32.totalorder %s54, 0
      %p205 = por %p203, %p204
      %s207 = sadd.s32 %s206, 1
      %p210 = scmp.eq.s32.totalorder %s48, 1
      %p211 = scmp.ne.s32.totalorder %s206, %s208
      %p212 = scmp.eq.s32.totalorder %s48, 0
      %p213 = por %p211, %p212
      %p214 = scmp.ne.s32.totalorder %s206, %s208
      %p215 = scmp.eq.s32.totalorder %s53, 1
      %p216 = por %p214, %p215
      %p217 = scmp.ne.s32.totalorder %s208, %s209
      %p218 = scmp.eq.s32.totalorder %s53, 0
      %p219 = por %p217, %p218
      %p220 = scmp.ne.s32.totalorder %s208, %s209
      %p221 = scmp.eq.s32.totalorder %s54, 1
      %p222 = por %p220, %p221
      %p224 = scmp.ne.s32.totalorder %s209, %s223
      %p225 = scmp.eq.s32.totalorder %s54, 0
      %p226 = por %p224, %p225
      %s228 = sadd.s32 %s227, 1
      %p231 = scmp.eq.s32.totalorder %s48, 1
      %p232 = scmp.ne.s32.totalorder %s227, %s229
      %p233 = scmp.eq.s32.totalorder %s48, 0
      %p234 = por %p232, %p233
      %p235 = scmp.ne.s32.totalorder %s227, %s229
      %p236 = scmp.eq.s32.totalorder %s53, 1
      %p237 = por %p235, %p236
      %p238 = scmp.ne.s32.totalorder %s229, %s230
      %p239 = scmp.eq.s32.totalorder %s53, 0
      %p240 = por %p238, %p239
      %p241 = scmp.ne.s32.totalorder %s229, %s230
      %p242 = scmp.eq.s32.totalorder %s54, 1
      %p243 = por %p241, %p242
      %p245 = scmp.ne.s32.totalorder %s230, %s244
      %p246 = scmp.eq.s32.totalorder %s54, 0
      %p247 = por %p245, %p246
      %s249 = sadd.s32 %s248, 1
      %p252 = scmp.eq.s32.totalorder %s48, 1
      %p253 = scmp.ne.s32.totalorder %s248, %s250
      %p254 = scmp.eq.s32.totalorder %s48, 0
      %p255 = por %p253, %p254
      %p256 = scmp.ne.s32.totalorder %s248, %s250
      %p257 = scmp.eq.s32.totalorder %s53, 1
      %p258 = por %p256, %p257
      %p259 = scmp.ne.s32.totalorder %s250, %s251
      %p260 = scmp.eq.s32.totalorder %s53, 0
      %p261 = por %p259, %p260
      %p262 = scmp.ne.s32.totalorder %s250, %s251
      %p263 = scmp.eq.s32.totalorder %s54, 1
      %p264 = por %p262, %p263
      %p266 = scmp.ne.s32.totalorder %s251, %s265
      %p267 = scmp.eq.s32.totalorder %s54, 0
      %p268 = por %p266, %p267
      %s270 = sadd.s32 %s269, 1
      %p273 = scmp.eq.s32.totalorder %s48, 1
      %p274 = scmp.ne.s32.totalorder %s269, %s271
      %p275 = scmp.eq.s32.totalorder %s48, 0
      %p276 = por %p274, %p275
      %p277 = scmp.ne.s32.totalorder %s269, %s271
      %p278 = scmp.eq.s32.totalorder %s53, 1
      %p279 = por %p277, %p278
      %p280 = scmp.ne.s32.totalorder %s271, %s272
      %p281 = scmp.eq.s32.totalorder %s53, 0
      %p282 = por %p280, %p281
      %p283 = scmp.ne.s32.totalorder %s271, %s272
      %p284 = scmp.eq.s32.totalorder %s54, 1
      %p285 = por %p283, %p284
      %p287 = scmp.ne.s32.totalorder %s272, %s286
      %p288 = scmp.eq.s32.totalorder %s54, 0
      %p289 = por %p287, %p288
      %s291 = sadd.s32 %s290, 1
      %p294 = scmp.eq.s32.totalorder %s48, 1
      %p295 = scmp.ne.s32.totalorder %s290, %s292
      %p296 = scmp.eq.s32.totalorder %s48, 0
      %p297 = por %p295, %p296
      %p298 = scmp.ne.s32.totalorder %s290, %s292
      %p299 = scmp.eq.s32.totalorder %s53, 1
      %p300 = por %p298, %p299
      %p301 = scmp.ne.s32.totalorder %s292, %s293
      %p302 = scmp.eq.s32.totalorder %s53, 0
      %p303 = por %p301, %p302
      %p304 = scmp.ne.s32.totalorder %s292, %s293
      %p305 = scmp.eq.s32.totalorder %s54, 1
      %p306 = por %p304, %p305
      %p308 = scmp.ne.s32.totalorder %s293, %s307
      %p309 = scmp.eq.s32.totalorder %s54, 0
      %p310 = por %p308, %p309
      %s312 = sadd.s32 %s311, 1
      %p315 = scmp.eq.s32.totalorder %s48, 1
      %p316 = scmp.ne.s32.totalorder %s311, %s313
      %p317 = scmp.eq.s32.totalorder %s48, 0
      %p318 = por %p316, %p317
      %p319 = scmp.ne.s32.totalorder %s311, %s313
      %p320 = scmp.eq.s32.totalorder %s53, 1
      %p321 = por %p319, %p320
      %p322 = scmp.ne.s32.totalorder %s313, %s314
      %p323 = scmp.eq.s32.totalorder %s53, 0
      %p324 = por %p322, %p323
      %p325 = scmp.ne.s32.totalorder %s313, %s314
      %p326 = scmp.eq.s32.totalorder %s54, 1
      %p327 = por %p325, %p326
      %p329 = scmp.ne.s32.totalorder %s314, %s328
      %p330 = scmp.eq.s32.totalorder %s54, 0
      %p331 = por %p329, %p330
      %s333 = sadd.s32 %s332, 1
      %p336 = scmp.eq.s32.totalorder %s48, 1
      %p337 = scmp.ne.s32.totalorder %s332, %s334
      %p338 = scmp.eq.s32.totalorder %s48, 0
      %p339 = por %p337, %p338
      %p340 = scmp.ne.s32.totalorder %s332, %s334
      %p341 = scmp.eq.s32.totalorder %s53, 1
      %p342 = por %p340, %p341
      %p343 = scmp.ne.s32.totalorder %s334, %s335
      %p344 = scmp.eq.s32.totalorder %s53, 0
      %p345 = por %p343, %p344
      %p346 = scmp.ne.s32.totalorder %s334, %s335
      %p347 = scmp.eq.s32.totalorder %s54, 1
      %p348 = por %p346, %p347
      %p350 = scmp.ne.s32.totalorder %s335, %s349
      %p351 = scmp.eq.s32.totalorder %s54, 0
      %p352 = por %p350, %p351
      %s354 = sadd.s32 %s353, 1
      %p357 = scmp.eq.s32.totalorder %s48, 1
      %p358 = scmp.ne.s32.totalorder %s353, %s355
      %p359 = scmp.eq.s32.totalorder %s48, 0
      %p360 = por %p358, %p359
      %p361 = scmp.ne.s32.totalorder %s353, %s355
      %p362 = scmp.eq.s32.totalorder %s53, 1
      %p363 = por %p361, %p362
      %p364 = scmp.ne.s32.totalorder %s355, %s356
      %p365 = scmp.eq.s32.totalorder %s53, 0
      %p366 = por %p364, %p365
      %p367 = scmp.ne.s32.totalorder %s355, %s356
      %p368 = scmp.eq.s32.totalorder %s54, 1
      %p369 = por %p367, %p368
      %p371 = scmp.ne.s32.totalorder %s356, %s370
      %p372 = scmp.eq.s32.totalorder %s54, 0
      %p373 = por %p371, %p372
      %s375 = sadd.s32 %s374, 1
      %p378 = scmp.eq.s32.totalorder %s48, 1
      %p379 = scmp.ne.s32.totalorder %s374, %s376
      %p380 = scmp.eq.s32.totalorder %s48, 0
      %p381 = por %p379, %p380
      %p382 = scmp.ne.s32.totalorder %s374, %s376
      %p383 = scmp.eq.s32.totalorder %s53, 1
      %p384 = por %p382, %p383
      %p385 = scmp.ne.s32.totalorder %s376, %s377
      %p386 = scmp.eq.s32.totalorder %s53, 0
      %p387 = por %p385, %p386
      %p388 = scmp.ne.s32.totalorder %s376, %s377
      %p389 = scmp.eq.s32.totalorder %s54, 1
      %p390 = por %p388, %p389
      %p392 = scmp.ne.s32.totalorder %s377, %s391
      %p393 = scmp.eq.s32.totalorder %s54, 0
      %p394 = por %p392, %p393
      %s396 = sadd.s32 %s395, 1
      %p399 = scmp.eq.s32.totalorder %s48, 1
      %p400 = scmp.ne.s32.totalorder %s395, %s397
      %p401 = scmp.eq.s32.totalorder %s48, 0
      %p402 = por %p400, %p401
      %p403 = scmp.ne.s32.totalorder %s395, %s397
      %p404 = scmp.eq.s32.totalorder %s53, 1
      %p405 = por %p403, %p404
      %p406 = scmp.ne.s32.totalorder %s397, %s398
      %p407 = scmp.eq.s32.totalorder %s53, 0
      %p408 = por %p406, %p407
      %p409 = scmp.ne.s32.totalorder %s397, %s398
      %p410 = scmp.eq.s32.totalorder %s54, 1
      %p411 = por %p409, %p410
      %p413 = scmp.ne.s32.totalorder %s398, %s412
      %p414 = scmp.eq.s32.totalorder %s54, 0
      %p415 = por %p413, %p414
      %s417 = sadd.s32 %s416, 1
      %p420 = scmp.eq.s32.totalorder %s48, 1
      %p421 = scmp.ne.s32.totalorder %s416, %s418
      %p422 = scmp.eq.s32.totalorder %s48, 0
      %p423 = por %p421, %p422
      %p424 = scmp.ne.s32.totalorder %s416, %s418
      %p425 = scmp.eq.s32.totalorder %s53, 1
      %p426 = por %p424, %p425
      %p427 = scmp.ne.s32.totalorder %s418, %s419
      %p428 = scmp.eq.s32.totalorder %s53, 0
      %p429 = por %p427, %p428
      %p430 = scmp.ne.s32.totalorder %s418, %s419
      %p431 = scmp.eq.s32.totalorder %s54, 1
      %p432 = por %p430, %p431
      %p434 = scmp.ne.s32.totalorder %s419, %s433
      %p435 = scmp.eq.s32.totalorder %s54, 0
      %p436 = por %p434, %p435
      %s438 = sadd.s32 %s437, 1
      %p441 = scmp.eq.s32.totalorder %s48, 1
      %p442 = scmp.ne.s32.totalorder %s437, %s439
      %p443 = scmp.eq.s32.totalorder %s48, 0
      %p444 = por %p442, %p443
      %p445 = scmp.ne.s32.totalorder %s437, %s439
      %p446 = scmp.eq.s32.totalorder %s53, 1
      %p447 = por %p445, %p446
      %p448 = scmp.ne.s32.totalorder %s439, %s440
      %p449 = scmp.eq.s32.totalorder %s53, 0
      %p450 = por %p448, %p449
      %p451 = scmp.ne.s32.totalorder %s439, %s440
      %p452 = scmp.eq.s32.totalorder %s54, 1
      %p453 = por %p451, %p452
      %p455 = scmp.ne.s32.totalorder %s440, %s454
      %p456 = scmp.eq.s32.totalorder %s54, 0
      %p457 = por %p455, %p456
      %s459 = sadd.s32 %s458, 1
      %p462 = scmp.eq.s32.totalorder %s48, 1
      %p463 = scmp.ne.s32.totalorder %s458, %s460
      %p464 = scmp.eq.s32.totalorder %s48, 0
      %p465 = por %p463, %p464
      %p466 = scmp.ne.s32.totalorder %s458, %s460
      %p467 = scmp.eq.s32.totalorder %s53, 1
      %p468 = por %p466, %p467
      %p469 = scmp.ne.s32.totalorder %s460, %s461
      %p470 = scmp.eq.s32.totalorder %s53, 0
      %p471 = por %p469, %p470
      %p472 = scmp.ne.s32.totalorder %s460, %s461
      %p473 = scmp.eq.s32.totalorder %s54, 1
      %p474 = por %p472, %p473
      %p476 = scmp.ne.s32.totalorder %s461, %s475
      %p477 = scmp.eq.s32.totalorder %s54, 0
      %p478 = por %p476, %p477
      %s480 = sadd.s32 %s479, 1
      %p483 = scmp.eq.s32.totalorder %s48, 1
      %p484 = scmp.ne.s32.totalorder %s479, %s481
      %p485 = scmp.eq.s32.totalorder %s48, 0
      %p486 = por %p484, %p485
      %p487 = scmp.ne.s32.totalorder %s479, %s481
      %p488 = scmp.eq.s32.totalorder %s53, 1
      %p489 = por %p487, %p488
      %p490 = scmp.ne.s32.totalorder %s481, %s482
      %p491 = scmp.eq.s32.totalorder %s53, 0
      %p492 = por %p490, %p491
      %p493 = scmp.ne.s32.totalorder %s481, %s482
      %p494 = scmp.eq.s32.totalorder %s54, 1
      %p495 = por %p493, %p494
      %p497 = scmp.ne.s32.totalorder %s482, %s496
      %p498 = scmp.eq.s32.totalorder %s54, 0
      %p499 = por %p497, %p498
      %s501 = sadd.s32 %s500, 1
      %p504 = scmp.eq.s32.totalorder %s48, 1
      %p505 = scmp.ne.s32.totalorder %s500, %s502
      %p506 = scmp.eq.s32.totalorder %s48, 0
      %p507 = por %p505, %p506
      %p508 = scmp.ne.s32.totalorder %s500, %s502
      %p509 = scmp.eq.s32.totalorder %s53, 1
      %p510 = por %p508, %p509
      %p511 = scmp.ne.s32.totalorder %s502, %s503
      %p512 = scmp.eq.s32.totalorder %s53, 0
      %p513 = por %p511, %p512
      %p514 = scmp.ne.s32.totalorder %s502, %s503
      %p515 = scmp.eq.s32.totalorder %s54, 1
      %p516 = por %p514, %p515
      %p518 = scmp.ne.s32.totalorder %s503, %s517
      %p519 = scmp.eq.s32.totalorder %s54, 0
      %p520 = por %p518, %p519
      %s522 = sadd.s32 %s521, 1
      %p525 = scmp.eq.s32.totalorder %s48, 1
      %p526 = scmp.ne.s32.totalorder %s521, %s523
      %p527 = scmp.eq.s32.totalorder %s48, 0
      %p528 = por %p526, %p527
      %p529 = scmp.ne.s32.totalorder %s521, %s523
      %p530 = scmp.eq.s32.totalorder %s53, 1
      %p531 = por %p529, %p530
      %p532 = scmp.ne.s32.totalorder %s523, %s524
      %p533 = scmp.eq.s32.totalorder %s53, 0
      %p534 = por %p532, %p533
      %p535 = scmp.ne.s32.totalorder %s523, %s524
      %p536 = scmp.eq.s32.totalorder %s54, 1
      %p537 = por %p535, %p536
      %p539 = scmp.ne.s32.totalorder %s524, %s538
      %p540 = scmp.eq.s32.totalorder %s54, 0
      %p541 = por %p539, %p540
      %s543 = sadd.s32 %s542, 1
      %p546 = scmp.eq.s32.totalorder %s48, 1
      %p547 = scmp.ne.s32.totalorder %s542, %s544
      %p548 = scmp.eq.s32.totalorder %s48, 0
      %p549 = por %p547, %p548
      %p550 = scmp.ne.s32.totalorder %s542, %s544
      %p551 = scmp.eq.s32.totalorder %s53, 1
      %p552 = por %p550, %p551
      %p553 = scmp.ne.s32.totalorder %s544, %s545
      %p554 = scmp.eq.s32.totalorder %s53, 0
      %p555 = por %p553, %p554
      %p556 = scmp.ne.s32.totalorder %s544, %s545
      %p557 = scmp.eq.s32.totalorder %s54, 1
      %p558 = por %p556, %p557
      %p560 = scmp.ne.s32.totalorder %s545, %s559
      %p561 = scmp.eq.s32.totalorder %s54, 0
      %p562 = por %p560, %p561
      %s563 = ssub.s32 %s55, %s67
      %s564 = ssub.s32 %s56, %s63
      %s565 = sor.u32 %s563, %s564
      %p566 = scmp.eq.s32.totalorder %s565, 0
      %s568 = sadd.s32 %s567, 1
      %s569 = scalar_select %p566, %s567, %s568
      %p572 = pneg %p566
      %p573 = scmp.eq.s32.totalorder %s48, 1
      %p574 = por %p572, %p573
      %p575 = scmp.ne.s32.totalorder %s567, %s570
      %p576 = scmp.eq.s32.totalorder %s48, 0
      %p577 = por %p575, %p576
      %p578 = scmp.ne.s32.totalorder %s567, %s570
      %p579 = scmp.eq.s32.totalorder %s53, 1
      %p580 = por %p578, %p579
      %p581 = scmp.ne.s32.totalorder %s570, %s571
      %p582 = scmp.eq.s32.totalorder %s53, 0
      %p583 = por %p581, %p582
      %p584 = scmp.ne.s32.totalorder %s570, %s571
      %p585 = scmp.eq.s32.totalorder %s54, 1
      %p586 = por %p584, %p585
      %p588 = scmp.ne.s32.totalorder %s571, %s587
      %p589 = scmp.eq.s32.totalorder %s54, 0
      %p590 = por %p588, %p589
      %p591 = scmp.le.s32.totalorder 1, %s48
      %p592 = scmp.lt.s32.totalorder %s48, 3
      %p593 = pnand %p591, %p592
      %p594 = pneg %p593
      // Predicated region
      $region9: #{linformer_forward.2} parent=5 // pred_check
        _
      $region10: #{linformer_forward.2} parent=5 // pred_check_branch
        %596 = sbr.rel (%p593) target = $region12
      $region11: #{linformer_forward.2} parent=5 // pred_region
        %s597 = ssub.s32 %s48, 1
        // Predicated region
        $region13: #{linformer_forward.2} parent=11 // pred_check
          %p598 = pneg %p135
        $region14: #{linformer_forward.2} parent=11 // pred_check_branch
          %600 = sbr.rel (%p598) target = $region16
        $region15: #{linformer_forward.2} parent=11 // pred_region
          %s602 = ssub.s32 256, 256
          %603 = vsyncadd [#allocation10], %s602
          %s604 = sshll.u32 [#allocation11], 4
          %s605 = int_to_ptr.vmem [resolvable:$true] %s604
          %610 = dma.hbm_to_vmem [thread:$0]  %s2, 256, %s605, [#allocation10], 64, 64, 4
        $region16: #{linformer_forward.2} parent=11 // pred_fallthru
          _
        // Predicated region
        $region17: #{linformer_forward.2} parent=11 // pred_check
          %p611 = pneg %p156
        $region18: #{linformer_forward.2} parent=11 // pred_check_branch
          %613 = sbr.rel (%p611) target = $region20
        $region19: #{linformer_forward.2} parent=11 // pred_region
          %s615 = ssub.s32 256, 256
          %616 = vsyncadd [#allocation13], %s615
          %s617 = sshll.u32 [#allocation12], 4
          %s618 = int_to_ptr.vmem [resolvable:$true] %s617
          %623 = dma.hbm_to_vmem [thread:$0]  %s3, 256, %s618, [#allocation13], 64, 64, 4
        $region20: #{linformer_forward.2} parent=11 // pred_fallthru
          _
        // Predicated region
        $region21: #{linformer_forward.2} parent=11 // pred_check
          %p624 = pneg %p177
        $region22: #{linformer_forward.2} parent=11 // pred_check_branch
          %626 = sbr.rel (%p624) target = $region24
        $region23: #{linformer_forward.2} parent=11 // pred_region
          %s628 = ssub.s32 256, 256
          %629 = vsyncadd [#allocation13], %s628
          %s630 = sshll.u32 [#allocation14], 4
          %s631 = int_to_ptr.vmem [resolvable:$true] %s630
          %636 = dma.hbm_to_vmem [thread:$0]  %s4, 256, %s631, [#allocation13], 64, 64, 4
        $region24: #{linformer_forward.2} parent=11 // pred_fallthru
          _
        // Predicated region
        $region25: #{linformer_forward.2} parent=11 // pred_check
          %p637 = pneg %p198
        $region26: #{linformer_forward.2} parent=11 // pred_check_branch
          %639 = sbr.rel (%p637) target = $region28
        $region27: #{linformer_forward.2} parent=11 // pred_region
          %s641 = ssub.s32 128, 128
          %642 = vsyncadd [#allocation16], %s641
          %s643 = sshll.u32 [#allocation15], 4
          %s644 = int_to_ptr.vmem [resolvable:$true] %s643
          %649 = dma.hbm_to_vmem [thread:$0]  %s5, 128, %s644, [#allocation16], 64, 64, 4
        $region28: #{linformer_forward.2} parent=11 // pred_fallthru
          _
        // Predicated region
        $region29: #{linformer_forward.2} parent=11 // pred_check
          %p650 = pneg %p219
        $region30: #{linformer_forward.2} parent=11 // pred_check_branch
          %652 = sbr.rel (%p650) target = $region32
        $region31: #{linformer_forward.2} parent=11 // pred_region
          %s654 = ssub.s32 16, 16
          %655 = vsyncadd [#allocation16], %s654
          %s657 = sshll.u32 [#allocation17], 4
          %s658 = int_to_ptr.vmem [resolvable:$true] %s657
          %660 = dma.hbm_to_vmem [thread:$0]  %s6, 16, %s658, [#allocation16]
        $region32: #{linformer_forward.2} parent=11 // pred_fallthru
          _
        // Predicated region
        $region33: #{linformer_forward.2} parent=11 // pred_check
          %p661 = pneg %p240
        $region34: #{linformer_forward.2} parent=11 // pred_check_branch
          %663 = sbr.rel (%p661) target = $region36
        $region35: #{linformer_forward.2} parent=11 // pred_region
          %s665 = ssub.s32 128, 128
          %666 = vsyncadd [#allocation19], %s665
          %s667 = sshll.u32 [#allocation18], 4
          %s668 = int_to_ptr.vmem [resolvable:$true] %s667
          %673 = dma.hbm_to_vmem [thread:$0]  %s7, 128, %s668, [#allocation19], 64, 64, 4
        $region36: #{linformer_forward.2} parent=11 // pred_fallthru
          _
        // Predicated region
        $region37: #{linformer_forward.2} parent=11 // pred_check
          %p674 = pneg %p261
        $region38: #{linformer_forward.2} parent=11 // pred_check_branch
          %676 = sbr.rel (%p674) target = $region40
        $region39: #{linformer_forward.2} parent=11 // pred_region
          %s678 = ssub.s32 16, 16
          %679 = vsyncadd [#allocation19], %s678
          %s681 = sshll.u32 [#allocation20], 4
          %s682 = int_to_ptr.vmem [resolvable:$true] %s681
          %684 = dma.hbm_to_vmem [thread:$0]  %s8, 16, %s682, [#allocation19]
        $region40: #{linformer_forward.2} parent=11 // pred_fallthru
          _
        // Predicated region
        $region41: #{linformer_forward.2} parent=11 // pred_check
          %p685 = pneg %p282
        $region42: #{linformer_forward.2} parent=11 // pred_check_branch
          %687 = sbr.rel (%p685) target = $region44
        $region43: #{linformer_forward.2} parent=11 // pred_region
          %s689 = ssub.s32 128, 128
          %690 = vsyncadd [#allocation22], %s689
          %s691 = sshll.u32 [#allocation21], 4
          %s692 = int_to_ptr.vmem [resolvable:$true] %s691
          %697 = dma.hbm_to_vmem [thread:$0]  %s9, 128, %s692, [#allocation22], 64, 64, 4
        $region44: #{linformer_forward.2} parent=11 // pred_fallthru
          _
        // Predicated region
        $region45: #{linformer_forward.2} parent=11 // pred_check
          %p698 = pneg %p303
        $region46: #{linformer_forward.2} parent=11 // pred_check_branch
          %700 = sbr.rel (%p698) target = $region48
        $region47: #{linformer_forward.2} parent=11 // pred_region
          %s702 = ssub.s32 16, 16
          %703 = vsyncadd [#allocation22], %s702
          %s705 = sshll.u32 [#allocation23], 4
          %s706 = int_to_ptr.vmem [resolvable:$true] %s705
          %708 = dma.hbm_to_vmem [thread:$0]  %s10, 16, %s706, [#allocation22]
        $region48: #{linformer_forward.2} parent=11 // pred_fallthru
          _
        // Predicated region
        $region49: #{linformer_forward.2} parent=11 // pred_check
          %p709 = pneg %p324
        $region50: #{linformer_forward.2} parent=11 // pred_check_branch
          %711 = sbr.rel (%p709) target = $region52
        $region51: #{linformer_forward.2} parent=11 // pred_region
          %s713 = ssub.s32 128, 128
          %714 = vsyncadd [#allocation25], %s713
          %s715 = sshll.u32 [#allocation24], 4
          %s716 = int_to_ptr.vmem [resolvable:$true] %s715
          %721 = dma.hbm_to_vmem [thread:$0]  %s11, 128, %s716, [#allocation25], 64, 64, 4
        $region52: #{linformer_forward.2} parent=11 // pred_fallthru
          _
        // Predicated region
        $region53: #{linformer_forward.2} parent=11 // pred_check
          %p722 = pneg %p345
        $region54: #{linformer_forward.2} parent=11 // pred_check_branch
          %724 = sbr.rel (%p722) target = $region56
        $region55: #{linformer_forward.2} parent=11 // pred_region
          %s726 = ssub.s32 256, 256
          %727 = vsyncadd [#allocation25], %s726
          %s728 = sshll.u32 [#allocation26], 4
          %s729 = int_to_ptr.vmem [resolvable:$true] %s728
          %734 = dma.hbm_to_vmem [thread:$0]  %s12, 256, %s729, [#allocation25], 128, 128, 8
        $region56: #{linformer_forward.2} parent=11 // pred_fallthru
          _
        // Predicated region
        $region57: #{linformer_forward.2} parent=11 // pred_check
          %p735 = pneg %p366
        $region58: #{linformer_forward.2} parent=11 // pred_check_branch
          %737 = sbr.rel (%p735) target = $region60
        $region59: #{linformer_forward.2} parent=11 // pred_region
          %s739 = ssub.s32 256, 256
          %740 = vsyncadd [#allocation28], %s739
          %s741 = sshll.u32 [#allocation27], 4
          %s742 = int_to_ptr.vmem [resolvable:$true] %s741
          %747 = dma.hbm_to_vmem [thread:$0]  %s13, 256, %s742, [#allocation28], 64, 64, 4
        $region60: #{linformer_forward.2} parent=11 // pred_fallthru
          _
        // Predicated region
        $region61: #{linformer_forward.2} parent=11 // pred_check
          %p748 = pneg %p387
        $region62: #{linformer_forward.2} parent=11 // pred_check_branch
          %750 = sbr.rel (%p748) target = $region64
        $region63: #{linformer_forward.2} parent=11 // pred_region
          %s752 = ssub.s32 16, 16
          %753 = vsyncadd [#allocation28], %s752
          %s755 = sshll.u32 [#allocation29], 4
          %s756 = int_to_ptr.vmem [resolvable:$true] %s755
          %758 = dma.hbm_to_vmem [thread:$0]  %s14, 16, %s756, [#allocation28]
        $region64: #{linformer_forward.2} parent=11 // pred_fallthru
          _
        // Predicated region
        $region65: #{linformer_forward.2} parent=11 // pred_check
          %p759 = pneg %p408
        $region66: #{linformer_forward.2} parent=11 // pred_check_branch
          %761 = sbr.rel (%p759) target = $region68
        $region67: #{linformer_forward.2} parent=11 // pred_region
          %s763 = ssub.s32 16, 16
          %764 = vsyncadd [#allocation31], %s763
          %s766 = sshll.u32 [#allocation30], 4
          %s767 = int_to_ptr.vmem [resolvable:$true] %s766
          %769 = dma.hbm_to_vmem [thread:$0]  %s15, 16, %s767, [#allocation31]
        $region68: #{linformer_forward.2} parent=11 // pred_fallthru
          _
        // Predicated region
        $region69: #{linformer_forward.2} parent=11 // pred_check
          %p770 = pneg %p429
        $region70: #{linformer_forward.2} parent=11 // pred_check_branch
          %772 = sbr.rel (%p770) target = $region72
        $region71: #{linformer_forward.2} parent=11 // pred_region
          %s774 = ssub.s32 16, 16
          %775 = vsyncadd [#allocation31], %s774
          %s777 = sshll.u32 [#allocation32], 4
          %s778 = int_to_ptr.vmem [resolvable:$true] %s777
          %780 = dma.hbm_to_vmem [thread:$0]  %s16, 16, %s778, [#allocation31]
        $region72: #{linformer_forward.2} parent=11 // pred_fallthru
          _
        // Predicated region
        $region73: #{linformer_forward.2} parent=11 // pred_check
          %p781 = pneg %p450
        $region74: #{linformer_forward.2} parent=11 // pred_check_branch
          %783 = sbr.rel (%p781) target = $region76
        $region75: #{linformer_forward.2} parent=11 // pred_region
          %s785 = ssub.s32 256, 256
          %786 = vsyncadd [#allocation34], %s785
          %s787 = sshll.u32 [#allocation33], 4
          %s788 = int_to_ptr.vmem [resolvable:$true] %s787
          %793 = dma.hbm_to_vmem [thread:$0]  %s17, 256, %s788, [#allocation34], 64, 64, 4
        $region76: #{linformer_forward.2} parent=11 // pred_fallthru
          _
        // Predicated region
        $region77: #{linformer_forward.2} parent=11 // pred_check
          %p794 = pneg %p471
        $region78: #{linformer_forward.2} parent=11 // pred_check_branch
          %796 = sbr.rel (%p794) target = $region80
        $region79: #{linformer_forward.2} parent=11 // pred_region
          %s798 = ssub.s32 16, 16
          %799 = vsyncadd [#allocation34], %s798
          %s801 = sshll.u32 [#allocation35], 4
          %s802 = int_to_ptr.vmem [resolvable:$true] %s801
          %804 = dma.hbm_to_vmem [thread:$0]  %s18, 16, %s802, [#allocation34]
        $region80: #{linformer_forward.2} parent=11 // pred_fallthru
          _
        // Predicated region
        $region81: #{linformer_forward.2} parent=11 // pred_check
          %p805 = pneg %p492
        $region82: #{linformer_forward.2} parent=11 // pred_check_branch
          %807 = sbr.rel (%p805) target = $region84
        $region83: #{linformer_forward.2} parent=11 // pred_region
          %s809 = ssub.s32 512, 512
          %810 = vsyncadd [#allocation37], %s809
          %s811 = sshll.u32 [#allocation36], 4
          %s812 = int_to_ptr.vmem [resolvable:$true] %s811
          %817 = dma.hbm_to_vmem [thread:$0]  %s19, 512, %s812, [#allocation37], 64, 64, 4
        $region84: #{linformer_forward.2} parent=11 // pred_fallthru
          _
        // Predicated region
        $region85: #{linformer_forward.2} parent=11 // pred_check
          %p818 = pneg %p513
        $region86: #{linformer_forward.2} parent=11 // pred_check_branch
          %820 = sbr.rel (%p818) target = $region88
        $region87: #{linformer_forward.2} parent=11 // pred_region
          %s822 = ssub.s32 16, 16
          %823 = vsyncadd [#allocation37], %s822
          %s825 = sshll.u32 [#allocation38], 4
          %s826 = int_to_ptr.vmem [resolvable:$true] %s825
          %828 = dma.hbm_to_vmem [thread:$0]  %s20, 16, %s826, [#allocation37]
        $region88: #{linformer_forward.2} parent=11 // pred_fallthru
          _
        // Predicated region
        $region89: #{linformer_forward.2} parent=11 // pred_check
          %p829 = pneg %p534
        $region90: #{linformer_forward.2} parent=11 // pred_check_branch
          %831 = sbr.rel (%p829) target = $region92
        $region91: #{linformer_forward.2} parent=11 // pred_region
          %s833 = ssub.s32 16, 16
          %834 = vsyncadd [#allocation40], %s833
          %s836 = sshll.u32 [#allocation39], 4
          %s837 = int_to_ptr.vmem [resolvable:$true] %s836
          %839 = dma.hbm_to_vmem [thread:$0]  %s21, 16, %s837, [#allocation40]
        $region92: #{linformer_forward.2} parent=11 // pred_fallthru
          _
        // Predicated region
        $region93: #{linformer_forward.2} parent=11 // pred_check
          %p840 = pneg %p555
        $region94: #{linformer_forward.2} parent=11 // pred_check_branch
          %842 = sbr.rel (%p840) target = $region96
        $region95: #{linformer_forward.2} parent=11 // pred_region
          %s844 = ssub.s32 16, 16
          %845 = vsyncadd [#allocation40], %s844
          %s847 = sshll.u32 [#allocation41], 4
          %s848 = int_to_ptr.vmem [resolvable:$true] %s847
          %850 = dma.hbm_to_vmem [thread:$0]  %s22, 16, %s848, [#allocation40]
        $region96: #{linformer_forward.2} parent=11 // pred_fallthru
          _
      $region12: #{linformer_forward.2} parent=5 // pred_fallthru
        _
      %p851 = scmp.lt.s32.totalorder %s48, 2
      // Predicated region
      $region97: #{linformer_forward.2} parent=5 // pred_check
        %p852 = pneg %p851
      $region98: #{linformer_forward.2} parent=5 // pred_check_branch
        %854 = sbr.rel (%p852) target = $region100
      $region99: #{linformer_forward.2} parent=5 // pred_region
        // Predicated region
        $region101: #{linformer_forward.2} parent=99 // pred_check
          %p855 = pneg %p80
        $region102: #{linformer_forward.2} parent=99 // pred_check_branch
          %857 = sbr.rel (%p855) target = $region104
        $region103: #{linformer_forward.2} parent=99 // pred_region
          %s858 = sand.u32 %s70, 1
          %s859 = scalar_lea.sflag [#allocation7], %s858
          %s860 = sand.u32 %s70, 1
          %s861 = smul.addr %s860, 8
          %s862 = scalar_lea.vmem [#allocation6], %s861
          %s864 = ssub.s32 128, 128
          %865 = vsyncadd %s859, %s864
          %s866 = smul.addr %s55, 128
          %s867 = scalar_lea.hbm %s0, %s866
          %s869 = sshll.u32 %s862, 4
          %s870 = int_to_ptr.vmem [resolvable:$true] %s869
          %872 = dma.hbm_to_vmem [thread:$0]  %s867, 128, %s870, %s859
        $region104: #{linformer_forward.2} parent=99 // pred_fallthru
          _
        // Predicated region
        $region105: #{linformer_forward.2} parent=99 // pred_check
          %p873 = pneg %p108
        $region106: #{linformer_forward.2} parent=99 // pred_check_branch
          %875 = sbr.rel (%p873) target = $region108
        $region107: #{linformer_forward.2} parent=99 // pred_region
          %s876 = sand.u32 %s48, 1
          %s877 = scalar_lea.sflag [#allocation10], %s876
          %s878 = sand.u32 %s98, 1
          %s879 = smul.addr %s878, 8
          %s880 = scalar_lea.vmem [#allocation9], %s879
          %s882 = ssub.s32 128, 128
          %883 = vsyncadd %s877, %s882
          %s884 = sadd.s32 %s56, %s55
          %s885 = smul.addr %s884, 128
          %s886 = scalar_lea.hbm %s1, %s885
          %s888 = sshll.u32 %s880, 4
          %s889 = int_to_ptr.vmem [resolvable:$true] %s888
          %891 = dma.hbm_to_vmem [thread:$0]  %s886, 128, %s889, %s877
        $region108: #{linformer_forward.2} parent=99 // pred_fallthru
          _
      $region100: #{linformer_forward.2} parent=5 // pred_fallthru
        _
      %p892 = scmp.le.s32.totalorder 1, %s48
      %p893 = scmp.lt.s32.totalorder %s48, 3
      %p894 = pnand %p892, %p893
      %p895 = pneg %p894
      // Predicated region
      $region109: #{linformer_forward.2} parent=5 // pred_check
        _
      $region110: #{linformer_forward.2} parent=5 // pred_check_branch
        %897 = sbr.rel (%p894) target = $region112
      $region111: #{linformer_forward.2} parent=5 // pred_region
        %s898 = ssub.s32 %s48, 1
        %s899 = sand.u32 %s73, 1
        %s900 = scalar_lea.sflag [#allocation7], %s899
        %s901 = sand.u32 %s73, 1
        %s902 = smul.addr %s901, 8
        %s903 = scalar_lea.vmem [#allocation6], %s902
        // Predicated region
        $region113: #{linformer_forward.2} parent=111 // pred_check
          %p904 = pneg %p86
        $region114: #{linformer_forward.2} parent=111 // pred_check_branch
          %906 = sbr.rel (%p904) target = $region116
        $region115: #{linformer_forward.2} parent=111 // pred_region
          %907 = dma.done %s900, 128
        $region116: #{linformer_forward.2} parent=111 // pred_fallthru
          _
        %s908 = sand.u32 %s53, 1
        %s909 = scalar_lea.sflag [#allocation10], %s908
        %s910 = sand.u32 %s101, 1
        %s911 = smul.addr %s910, 8
        %s912 = scalar_lea.vmem [#allocation9], %s911
        // Predicated region
        $region117: #{linformer_forward.2} parent=111 // pred_check
          %p913 = pneg %p114
        $region118: #{linformer_forward.2} parent=111 // pred_check_branch
          %915 = sbr.rel (%p913) target = $region120
        $region119: #{linformer_forward.2} parent=111 // pred_region
          %916 = dma.done %s909, 128
        $region120: #{linformer_forward.2} parent=111 // pred_fallthru
          _
        // Predicated region
        $region121: #{linformer_forward.2} parent=111 // pred_check
          %p917 = pneg %p135
        $region122: #{linformer_forward.2} parent=111 // pred_check_branch
          %919 = sbr.rel (%p917) target = $region124
        $region123: #{linformer_forward.2} parent=111 // pred_region
          %920 = dma.done [#allocation10], 256
        $region124: #{linformer_forward.2} parent=111 // pred_fallthru
          _
        // Predicated region
        $region125: #{linformer_forward.2} parent=111 // pred_check
          %p921 = pneg %p156
        $region126: #{linformer_forward.2} parent=111 // pred_check_branch
          %923 = sbr.rel (%p921) target = $region128
        $region127: #{linformer_forward.2} parent=111 // pred_region
          %924 = dma.done [#allocation13], 256
        $region128: #{linformer_forward.2} parent=111 // pred_fallthru
          _
        // Predicated region
        $region129: #{linformer_forward.2} parent=111 // pred_check
          %p925 = pneg %p177
        $region130: #{linformer_forward.2} parent=111 // pred_check_branch
          %927 = sbr.rel (%p925) target = $region132
        $region131: #{linformer_forward.2} parent=111 // pred_region
          %928 = dma.done [#allocation13], 256
        $region132: #{linformer_forward.2} parent=111 // pred_fallthru
          _
        // Predicated region
        $region133: #{linformer_forward.2} parent=111 // pred_check
          %p929 = pneg %p198
        $region134: #{linformer_forward.2} parent=111 // pred_check_branch
          %931 = sbr.rel (%p929) target = $region136
        $region135: #{linformer_forward.2} parent=111 // pred_region
          %932 = dma.done [#allocation16], 128
        $region136: #{linformer_forward.2} parent=111 // pred_fallthru
          _
        // Predicated region
        $region137: #{linformer_forward.2} parent=111 // pred_check
          %p933 = pneg %p219
        $region138: #{linformer_forward.2} parent=111 // pred_check_branch
          %935 = sbr.rel (%p933) target = $region140
        $region139: #{linformer_forward.2} parent=111 // pred_region
          %936 = dma.done [#allocation16], 16
        $region140: #{linformer_forward.2} parent=111 // pred_fallthru
          _
        // Predicated region
        $region141: #{linformer_forward.2} parent=111 // pred_check
          %p937 = pneg %p240
        $region142: #{linformer_forward.2} parent=111 // pred_check_branch
          %939 = sbr.rel (%p937) target = $region144
        $region143: #{linformer_forward.2} parent=111 // pred_region
          %940 = dma.done [#allocation19], 128
        $region144: #{linformer_forward.2} parent=111 // pred_fallthru
          _
        // Predicated region
        $region145: #{linformer_forward.2} parent=111 // pred_check
          %p941 = pneg %p261
        $region146: #{linformer_forward.2} parent=111 // pred_check_branch
          %943 = sbr.rel (%p941) target = $region148
        $region147: #{linformer_forward.2} parent=111 // pred_region
          %944 = dma.done [#allocation19], 16
        $region148: #{linformer_forward.2} parent=111 // pred_fallthru
          _
        // Predicated region
        $region149: #{linformer_forward.2} parent=111 // pred_check
          %p945 = pneg %p282
        $region150: #{linformer_forward.2} parent=111 // pred_check_branch
          %947 = sbr.rel (%p945) target = $region152
        $region151: #{linformer_forward.2} parent=111 // pred_region
          %948 = dma.done [#allocation22], 128
        $region152: #{linformer_forward.2} parent=111 // pred_fallthru
          _
        // Predicated region
        $region153: #{linformer_forward.2} parent=111 // pred_check
          %p949 = pneg %p303
        $region154: #{linformer_forward.2} parent=111 // pred_check_branch
          %951 = sbr.rel (%p949) target = $region156
        $region155: #{linformer_forward.2} parent=111 // pred_region
          %952 = dma.done [#allocation22], 16
        $region156: #{linformer_forward.2} parent=111 // pred_fallthru
          _
        // Predicated region
        $region157: #{linformer_forward.2} parent=111 // pred_check
          %p953 = pneg %p324
        $region158: #{linformer_forward.2} parent=111 // pred_check_branch
          %955 = sbr.rel (%p953) target = $region160
        $region159: #{linformer_forward.2} parent=111 // pred_region
          %956 = dma.done [#allocation25], 128
        $region160: #{linformer_forward.2} parent=111 // pred_fallthru
          _
        // Predicated region
        $region161: #{linformer_forward.2} parent=111 // pred_check
          %p957 = pneg %p345
        $region162: #{linformer_forward.2} parent=111 // pred_check_branch
          %959 = sbr.rel (%p957) target = $region164
        $region163: #{linformer_forward.2} parent=111 // pred_region
          %960 = dma.done [#allocation25], 256
        $region164: #{linformer_forward.2} parent=111 // pred_fallthru
          _
        // Predicated region
        $region165: #{linformer_forward.2} parent=111 // pred_check
          %p961 = pneg %p366
        $region166: #{linformer_forward.2} parent=111 // pred_check_branch
          %963 = sbr.rel (%p961) target = $region168
        $region167: #{linformer_forward.2} parent=111 // pred_region
          %964 = dma.done [#allocation28], 256
        $region168: #{linformer_forward.2} parent=111 // pred_fallthru
          _
        // Predicated region
        $region169: #{linformer_forward.2} parent=111 // pred_check
          %p965 = pneg %p387
        $region170: #{linformer_forward.2} parent=111 // pred_check_branch
          %967 = sbr.rel (%p965) target = $region172
        $region171: #{linformer_forward.2} parent=111 // pred_region
          %968 = dma.done [#allocation28], 16
        $region172: #{linformer_forward.2} parent=111 // pred_fallthru
          _
        // Predicated region
        $region173: #{linformer_forward.2} parent=111 // pred_check
          %p969 = pneg %p408
        $region174: #{linformer_forward.2} parent=111 // pred_check_branch
          %971 = sbr.rel (%p969) target = $region176
        $region175: #{linformer_forward.2} parent=111 // pred_region
          %972 = dma.done [#allocation31], 16
        $region176: #{linformer_forward.2} parent=111 // pred_fallthru
          _
        // Predicated region
        $region177: #{linformer_forward.2} parent=111 // pred_check
          %p973 = pneg %p429
        $region178: #{linformer_forward.2} parent=111 // pred_check_branch
          %975 = sbr.rel (%p973) target = $region180
        $region179: #{linformer_forward.2} parent=111 // pred_region
          %976 = dma.done [#allocation31], 16
        $region180: #{linformer_forward.2} parent=111 // pred_fallthru
          _
        // Predicated region
        $region181: #{linformer_forward.2} parent=111 // pred_check
          %p977 = pneg %p450
        $region182: #{linformer_forward.2} parent=111 // pred_check_branch
          %979 = sbr.rel (%p977) target = $region184
        $region183: #{linformer_forward.2} parent=111 // pred_region
          %980 = dma.done [#allocation34], 256
        $region184: #{linformer_forward.2} parent=111 // pred_fallthru
          _
        // Predicated region
        $region185: #{linformer_forward.2} parent=111 // pred_check
          %p981 = pneg %p471
        $region186: #{linformer_forward.2} parent=111 // pred_check_branch
          %983 = sbr.rel (%p981) target = $region188
        $region187: #{linformer_forward.2} parent=111 // pred_region
          %984 = dma.done [#allocation34], 16
        $region188: #{linformer_forward.2} parent=111 // pred_fallthru
          _
        // Predicated region
        $region189: #{linformer_forward.2} parent=111 // pred_check
          %p985 = pneg %p492
        $region190: #{linformer_forward.2} parent=111 // pred_check_branch
          %987 = sbr.rel (%p985) target = $region192
        $region191: #{linformer_forward.2} parent=111 // pred_region
          %988 = dma.done [#allocation37], 512
        $region192: #{linformer_forward.2} parent=111 // pred_fallthru
          _
        // Predicated region
        $region193: #{linformer_forward.2} parent=111 // pred_check
          %p989 = pneg %p513
        $region194: #{linformer_forward.2} parent=111 // pred_check_branch
          %991 = sbr.rel (%p989) target = $region196
        $region195: #{linformer_forward.2} parent=111 // pred_region
          %992 = dma.done [#allocation37], 16
        $region196: #{linformer_forward.2} parent=111 // pred_fallthru
          _
        // Predicated region
        $region197: #{linformer_forward.2} parent=111 // pred_check
          %p993 = pneg %p534
        $region198: #{linformer_forward.2} parent=111 // pred_check_branch
          %995 = sbr.rel (%p993) target = $region200
        $region199: #{linformer_forward.2} parent=111 // pred_region
          %996 = dma.done [#allocation40], 16
        $region200: #{linformer_forward.2} parent=111 // pred_fallthru
          _
        // Predicated region
        $region201: #{linformer_forward.2} parent=111 // pred_check
          %p997 = pneg %p555
        $region202: #{linformer_forward.2} parent=111 // pred_check_branch
          %999 = sbr.rel (%p997) target = $region204
        $region203: #{linformer_forward.2} parent=111 // pred_region
          %1000 = dma.done [#allocation40], 16
        $region204: #{linformer_forward.2} parent=111 // pred_fallthru
          _
        %s1001 = sand.u32 %s73, 1
        %s1002 = scalar_lea.sflag [#allocation7], %s1001
        %s1003 = sand.u32 %s73, 1
        %s1004 = smul.addr %s1003, 8
        %s1005 = scalar_lea.vmem [#allocation6], %s1004
        %p1006 = pneg %p86
        %p1007 = pneg %p83
        %s1008 = sand.u32 %s53, 1
        %s1009 = scalar_lea.sflag [#allocation10], %s1008
        %s1010 = sand.u32 %s101, 1
        %s1011 = smul.addr %s1010, 8
        %s1012 = scalar_lea.vmem [#allocation9], %s1011
        %p1013 = pneg %p114
        %p1014 = pneg %p111
        %p1015 = pneg %p135
        %p1016 = pneg %p132
        %p1017 = pneg %p156
        %p1018 = pneg %p153
        %p1019 = pneg %p177
        %p1020 = pneg %p174
        %p1021 = pneg %p198
        %p1022 = pneg %p195
        %p1023 = pneg %p219
        %p1024 = pneg %p216
        %p1025 = pneg %p240
        %p1026 = pneg %p237
        %p1027 = pneg %p261
        %p1028 = pneg %p258
        %p1029 = pneg %p282
        %p1030 = pneg %p279
        %p1031 = pneg %p303
        %p1032 = pneg %p300
        %p1033 = pneg %p324
        %p1034 = pneg %p321
        %p1035 = pneg %p345
        %p1036 = pneg %p342
        %p1037 = pneg %p366
        %p1038 = pneg %p363
        %p1039 = pneg %p387
        %p1040 = pneg %p384
        %p1041 = pneg %p408
        %p1042 = pneg %p405
        %p1043 = pneg %p429
        %p1044 = pneg %p426
        %p1045 = pneg %p450
        %p1046 = pneg %p447
        %p1047 = pneg %p471
        %p1048 = pneg %p468
        %p1049 = pneg %p492
        %p1050 = pneg %p489
        %p1051 = pneg %p513
        %p1052 = pneg %p510
        %p1053 = pneg %p534
        %p1054 = pneg %p531
        %p1055 = pneg %p555
        %p1056 = pneg %p552
        %p1057 = pneg %p583
        %p1058 = pneg %p580
        %s1059 = sand.u32 %s570, 1
        %s1060 = scalar_lea.sflag [#allocation8], %s1059
        %s1061 = sand.u32 %s570, 1
        %s1062 = smul.addr %s1061, 8
        %s1063 = scalar_lea.vmem [#allocation42], %s1062
        %p1065 = scmp.eq.s32.totalorder %s58, 0
        // Predicated region
        $region205: #{linformer_forward.2} parent=111 // pred_check
          %p1066 = pneg %p1065
        $region206: #{linformer_forward.2} parent=111 // pred_check_branch
          %1068 = sbr.rel (%p1066) target = $region208
        $region207: #{linformer_forward.2} parent=111 // pred_region
          %v1069 = vld [vmem:[%s903] sm:$0xff]
          %v1070 = vpack.c.bf16 %v1069, %v1069
          %v1071 = vld [vmem:[#allocation12] sm:$0xf]
          %v1072 = vld [vmem:[#allocation12 + $0x4] sm:$0xf]
          %v1073 = vld [vmem:[#allocation12 + $0x8] sm:$0xf]
          %v1074 = vld [vmem:[#allocation12 + $0xc] sm:$0xf]
          %v1079 = vunpack.c.l.b16 %v1071
          %v1080 = vunpack.c.l.b16 %v1072
          %v1081 = vunpack.c.l.b16 %v1073
          %v1082 = vunpack.c.l.b16 %v1074
          %v1083 = vpack.c.b16 %v1080, %v1079
          %v1084 = vpack.c.b16 %v1082, %v1081
          %vm1087 = vcmask 261120
          %v1089 = vsel %vm1087, %v1070, 0
          %1091 = vmatprep.subr.bf16.mxu0 0
          %1092 = vmatpush1.bf16.msra.mxu0 %v1083
          %1093 = vmatprep.subr.bf16.mxu0 0
          %1094 = vmatpush1.bf16.msra.mxu0 %v1084
          %1095 = vmatprep.subr.bf16.mxu0 0
          %1096 = vmatpush1.bf16.msra.mxu0 0
          %1097 = vmatprep.subr.bf16.mxu0 0
          %1098 = vmatpush1.bf16.msra.mxu0 0
          %1099 = vmatprep.subr.bf16.mxu0 0
          %1100 = vmatpush1.bf16.msra.mxu0 0
          %1101 = vmatprep.subr.bf16.mxu0 0
          %1102 = vmatpush1.bf16.msra.mxu0 0
          %1103 = vmatprep.subr.bf16.mxu0 0
          %1104 = vmatpush1.bf16.msra.mxu0 0
          %1105 = vmatprep.subr.bf16.mxu0 0
          %1106 = vmatpush1.bf16.msra.mxu0 0
          %1107 = vmatprep.subr.bf16.mxu0 0
          %1108 = vmatpush1.bf16.msra.mxu0 0
          %1109 = vmatprep.subr.bf16.mxu0 0
          %1110 = vmatpush1.bf16.msra.mxu0 0
          %1111 = vmatprep.subr.bf16.mxu0 0
          %1112 = vmatpush1.bf16.msra.mxu0 0
          %1113 = vmatprep.subr.bf16.mxu0 0
          %1114 = vmatpush1.bf16.msra.mxu0 0
          %1115 = vmatprep.subr.bf16.mxu0 0
          %1116 = vmatpush1.bf16.msra.mxu0 0
          %1117 = vmatprep.subr.bf16.mxu0 0
          %1118 = vmatpush1.bf16.msra.mxu0 0
          %1119 = vmatprep.subr.bf16.mxu0 0
          %1120 = vmatpush1.bf16.msra.mxu0 0
          %1121 = vmatprep.subr.bf16.mxu0 0
          %1122 = vmatpush1.bf16.msra.mxu0 0
          %1123 = vmatprep.mubr.bf16.mxu0 0
          %1124 = vmatmul.mubr.bf16.gmra.mrb[0].mxu0 %v1089
          %v1125 = vpop.f32.mrb[0].mxu0
          %v1126 = vadd.f32 0.0, %v1125
          %v1127 = vpop.f32.mrb[0].mxu0
          %v1128 = vpop.f32.mrb[0].mxu0
          %v1129 = vpop.f32.mrb[0].mxu0
          %1130 = vdwg.mxu0
          %v1131 = vld [vmem:[#allocation14] sm:$0xf]
          %v1132 = vld [vmem:[#allocation14 + $0x4] sm:$0xf]
          %v1133 = vld [vmem:[#allocation14 + $0x8] sm:$0xf]
          %v1134 = vld [vmem:[#allocation14 + $0xc] sm:$0xf]
          %v1139 = vunpack.c.l.b16 %v1131
          %v1140 = vunpack.c.l.b16 %v1132
          %v1141 = vunpack.c.l.b16 %v1133
          %v1142 = vunpack.c.l.b16 %v1134
          %v1143 = vpack.c.b16 %v1140, %v1139
          %v1144 = vpack.c.b16 %v1142, %v1141
          %1147 = vmatprep.subr.bf16.mxu0 0
          %1148 = vmatpush1.bf16.msra.mxu0 %v1143
          %1149 = vmatprep.subr.bf16.mxu0 0
          %1150 = vmatpush1.bf16.msra.mxu0 %v1144
          %1151 = vmatprep.subr.bf16.mxu0 0
          %1152 = vmatpush1.bf16.msra.mxu0 0
          %1153 = vmatprep.subr.bf16.mxu0 0
          %1154 = vmatpush1.bf16.msra.mxu0 0
          %1155 = vmatprep.subr.bf16.mxu0 0
          %1156 = vmatpush1.bf16.msra.mxu0 0
          %1157 = vmatprep.subr.bf16.mxu0 0
          %1158 = vmatpush1.bf16.msra.mxu0 0
          %1159 = vmatprep.subr.bf16.mxu0 0
          %1160 = vmatpush1.bf16.msra.mxu0 0
          %1161 = vmatprep.subr.bf16.mxu0 0
          %1162 = vmatpush1.bf16.msra.mxu0 0
          %1163 = vmatprep.subr.bf16.mxu0 0
          %1164 = vmatpush1.bf16.msra.mxu0 0
          %1165 = vmatprep.subr.bf16.mxu0 0
          %1166 = vmatpush1.bf16.msra.mxu0 0
          %1167 = vmatprep.subr.bf16.mxu0 0
          %1168 = vmatpush1.bf16.msra.mxu0 0
          %1169 = vmatprep.subr.bf16.mxu0 0
          %1170 = vmatpush1.bf16.msra.mxu0 0
          %1171 = vmatprep.subr.bf16.mxu0 0
          %1172 = vmatpush1.bf16.msra.mxu0 0
          %1173 = vmatprep.subr.bf16.mxu0 0
          %1174 = vmatpush1.bf16.msra.mxu0 0
          %1175 = vmatprep.subr.bf16.mxu0 0
          %1176 = vmatpush1.bf16.msra.mxu0 0
          %1177 = vmatprep.subr.bf16.mxu0 0
          %1178 = vmatpush1.bf16.msra.mxu0 0
          %1179 = vmatprep.mubr.bf16.mxu0 0
          %1180 = vmatmul.mubr.bf16.gmra.mrb[0].mxu0 %v1089
          %v1181 = vpop.f32.mrb[0].mxu0
          %v1182 = vadd.f32 0.0, %v1181
          %v1183 = vpop.f32.mrb[0].mxu0
          %v1184 = vpop.f32.mrb[0].mxu0
          %v1185 = vpop.f32.mrb[0].mxu0
          %1186 = vdwg.mxu0
          %v1187 = vpack.c.bf16 %v1126, %v1126
          %v1188 = vld [vmem:[#allocation18] sm:$0xf]
          %v1189 = vld [vmem:[#allocation18 + $0x4] sm:$0xf]
          %v1190 = vld [vmem:[#allocation20] sm:$0x1]
          %v1192 = vlaneseq
          %v1193 = vshrl.u32 %v1192, 7
          %v1194 = vsub.s32 0, %v1193
          %v1195 = vrot.slane %v1190, %v1194
          %v1199 = vunpack.c.l.b16 %v1188
          %v1200 = vunpack.c.l.b16 %v1189
          %v1201 = vpack.c.b16 %v1200, %v1199
          %vm1203 = vcmask 130048
          %v1205 = vsel %vm1203, %v1187, 0
          %1207 = vmatprep.subr.bf16.mxu0 0
          %1208 = vmatpush1.bf16.msra.mxu0 %v1201
          %1209 = vmatprep.subr.bf16.mxu0 0
          %1210 = vmatpush1.bf16.msra.mxu0 0
          %1211 = vmatprep.subr.bf16.mxu0 0
          %1212 = vmatpush1.bf16.msra.mxu0 0
          %1213 = vmatprep.subr.bf16.mxu0 0
          %1214 = vmatpush1.bf16.msra.mxu0 0
          %1215 = vmatprep.subr.bf16.mxu0 0
          %1216 = vmatpush1.bf16.msra.mxu0 0
          %1217 = vmatprep.subr.bf16.mxu0 0
          %1218 = vmatpush1.bf16.msra.mxu0 0
          %1219 = vmatprep.subr.bf16.mxu0 0
          %1220 = vmatpush1.bf16.msra.mxu0 0
          %1221 = vmatprep.subr.bf16.mxu0 0
          %1222 = vmatpush1.bf16.msra.mxu0 0
          %1223 = vmatprep.subr.bf16.mxu0 0
          %1224 = vmatpush1.bf16.msra.mxu0 0
          %1225 = vmatprep.subr.bf16.mxu0 0
          %1226 = vmatpush1.bf16.msra.mxu0 0
          %1227 = vmatprep.subr.bf16.mxu0 0
          %1228 = vmatpush1.bf16.msra.mxu0 0
          %1229 = vmatprep.subr.bf16.mxu0 0
          %1230 = vmatpush1.bf16.msra.mxu0 0
          %1231 = vmatprep.subr.bf16.mxu0 0
          %1232 = vmatpush1.bf16.msra.mxu0 0
          %1233 = vmatprep.subr.bf16.mxu0 0
          %1234 = vmatpush1.bf16.msra.mxu0 0
          %1235 = vmatprep.subr.bf16.mxu0 0
          %1236 = vmatpush1.bf16.msra.mxu0 0
          %1237 = vmatprep.subr.bf16.mxu0 0
          %1238 = vmatpush1.bf16.msra.mxu0 0
          %1239 = vmatprep.mubr.bf16.mxu0 0
          %1240 = vmatmul.mubr.bf16.gmra.mrb[0].mxu0 %v1205
          %v1241 = vpop.f32.mrb[0].mxu0
          %v1242 = vadd.f32 %v1195, %v1241
          %v1243 = vpop.f32.mrb[0].mxu0
          %v1244 = vpop.f32.mrb[0].mxu0
          %v1245 = vpop.f32.mrb[0].mxu0
          %1246 = vdwg.mxu0
          %v1247 = vpack.c.bf16 %v1182, %v1182
          %v1248 = vld [vmem:[#allocation21] sm:$0xf]
          %v1249 = vld [vmem:[#allocation21 + $0x4] sm:$0xf]
          %v1250 = vld [vmem:[#allocation23] sm:$0x1]
          %v1252 = vlaneseq
          %v1253 = vshrl.u32 %v1252, 7
          %v1254 = vsub.s32 0, %v1253
          %v1255 = vrot.slane %v1250, %v1254
          %v1259 = vunpack.c.l.b16 %v1248
          %v1260 = vunpack.c.l.b16 %v1249
          %v1261 = vpack.c.b16 %v1260, %v1259
          %v1264 = vsel %vm1203, %v1247, 0
          %1266 = vmatprep.subr.bf16.mxu0 0
          %1267 = vmatpush1.bf16.msra.mxu0 %v1261
          %1268 = vmatprep.subr.bf16.mxu0 0
          %1269 = vmatpush1.bf16.msra.mxu0 0
          %1270 = vmatprep.subr.bf16.mxu0 0
          %1271 = vmatpush1.bf16.msra.mxu0 0
          %1272 = vmatprep.subr.bf16.mxu0 0
          %1273 = vmatpush1.bf16.msra.mxu0 0
          %1274 = vmatprep.subr.bf16.mxu0 0
          %1275 = vmatpush1.bf16.msra.mxu0 0
          %1276 = vmatprep.subr.bf16.mxu0 0
          %1277 = vmatpush1.bf16.msra.mxu0 0
          %1278 = vmatprep.subr.bf16.mxu0 0
          %1279 = vmatpush1.bf16.msra.mxu0 0
          %1280 = vmatprep.subr.bf16.mxu0 0
          %1281 = vmatpush1.bf16.msra.mxu0 0
          %1282 = vmatprep.subr.bf16.mxu0 0
          %1283 = vmatpush1.bf16.msra.mxu0 0
          %1284 = vmatprep.subr.bf16.mxu0 0
          %1285 = vmatpush1.bf16.msra.mxu0 0
          %1286 = vmatprep.subr.bf16.mxu0 0
          %1287 = vmatpush1.bf16.msra.mxu0 0
          %1288 = vmatprep.subr.bf16.mxu0 0
          %1289 = vmatpush1.bf16.msra.mxu0 0
          %1290 = vmatprep.subr.bf16.mxu0 0
          %1291 = vmatpush1.bf16.msra.mxu0 0
          %1292 = vmatprep.subr.bf16.mxu0 0
          %1293 = vmatpush1.bf16.msra.mxu0 0
          %1294 = vmatprep.subr.bf16.mxu0 0
          %1295 = vmatpush1.bf16.msra.mxu0 0
          %1296 = vmatprep.subr.bf16.mxu0 0
          %1297 = vmatpush1.bf16.msra.mxu0 0
          %1298 = vmatprep.mubr.bf16.mxu0 0
          %1299 = vmatmul.mubr.bf16.gmra.mrb[0].mxu0 %v1264
          %v1300 = vpop.f32.mrb[0].mxu0
          %v1301 = vadd.f32 %v1255, %v1300
          %v1302 = vpop.f32.mrb[0].mxu0
          %v1303 = vpop.f32.mrb[0].mxu0
          %v1304 = vpop.f32.mrb[0].mxu0
          %1305 = vdwg.mxu0
          %v1306 = vld [vmem:[#allocation24] sm:$0xf]
          %v1307 = vld [vmem:[#allocation24 + $0x4] sm:$0xf]
          %v1308 = vpack.c.bf16 %v1242, %v1242
          %v1309 = vpack.c.bf16 %v1301, %v1301
          %v1310 = vld [vmem:[#allocation26] sm:$0xff]
          %v1311 = vld [vmem:[#allocation26 + $0x8] sm:$0xff]
          %1313 = vset.pattern.permute.xlu0 0
          %1314 = vperm.xlu0 %1313, %v1310
          %v1315 = vpop.permute.xlu0 %1314
          %1318 = vset.pattern.permute.xlu0 0
          %1319 = vperm.xlu0 %1318, %v1311
          %v1320 = vpop.permute.xlu0 %1319
          %v1324 = vunpack.c.l.b16 %v1306
          %v1325 = vunpack.c.l.b16 %v1307
          %v1326 = vpack.c.b16 %v1325, %v1324
          %vm1327 = vcmask 64512
          %v1329 = vsel %vm1327, %v1326, 0
          %vm1331 = vcmask 1043456
          %v1333 = vsel %vm1331, %v1308, 0
          %1335 = vmatprep.subr.bf16.mxu0 0
          %1336 = vmatpush1.bf16.msra.mxu0 %v1333
          %1337 = vmatprep.subr.bf16.mxu0 0
          %1338 = vmatpush1.bf16.msra.mxu0 0
          %1339 = vmatprep.subr.bf16.mxu0 0
          %1340 = vmatpush1.bf16.msra.mxu0 0
          %1341 = vmatprep.subr.bf16.mxu0 0
          %1342 = vmatpush1.bf16.msra.mxu0 0
          %1343 = vmatprep.subr.bf16.mxu0 0
          %1344 = vmatpush1.bf16.msra.mxu0 0
          %1345 = vmatprep.subr.bf16.mxu0 0
          %1346 = vmatpush1.bf16.msra.mxu0 0
          %1347 = vmatprep.subr.bf16.mxu0 0
          %1348 = vmatpush1.bf16.msra.mxu0 0
          %1349 = vmatprep.subr.bf16.mxu0 0
          %1350 = vmatpush1.bf16.msra.mxu0 0
          %1351 = vmatprep.subr.bf16.mxu0 0
          %1352 = vmatpush1.bf16.msra.mxu0 0
          %1353 = vmatprep.subr.bf16.mxu0 0
          %1354 = vmatpush1.bf16.msra.mxu0 0
          %1355 = vmatprep.subr.bf16.mxu0 0
          %1356 = vmatpush1.bf16.msra.mxu0 0
          %1357 = vmatprep.subr.bf16.mxu0 0
          %1358 = vmatpush1.bf16.msra.mxu0 0
          %1359 = vmatprep.subr.bf16.mxu0 0
          %1360 = vmatpush1.bf16.msra.mxu0 0
          %1361 = vmatprep.subr.bf16.mxu0 0
          %1362 = vmatpush1.bf16.msra.mxu0 0
          %1363 = vmatprep.subr.bf16.mxu0 0
          %1364 = vmatpush1.bf16.msra.mxu0 0
          %1365 = vmatprep.subr.bf16.mxu0 0
          %1366 = vmatpush1.bf16.msra.mxu0 0
          %1367 = vmatprep.mubr.bf16.mxu0 0
          %1368 = vmatmul.mubr.bf16.gmra.mrb[0].mxu0 %v1329
          %v1369 = vpop.f32.mrb[0].mxu0
          %v1370 = vadd.f32 %v1315, %v1369
          %v1371 = vpop.f32.mrb[0].mxu0
          %v1372 = vpop.f32.mrb[0].mxu0
          %v1373 = vadd.f32 %v1320, %v1372
          %v1374 = vpop.f32.mrb[0].mxu0
          %1375 = vdwg.mxu0
          %v1376 = vpack.c.bf16 %v1373, %v1370
          %1377 = vst.msk [vmem:[#allocation3] sm:$0xff] %vm1087, %v1376
          %v1378 = vld [vmem:[#allocation26] sm:$0xff]
          %v1379 = vld [vmem:[#allocation26 + $0x8] sm:$0xff]
          %1381 = vset.pattern.permute.xlu0 0
          %1382 = vperm.xlu0 %1381, %v1378
          %v1383 = vpop.permute.xlu0 %1382
          %1386 = vset.pattern.permute.xlu0 0
          %1387 = vperm.xlu0 %1386, %v1379
          %v1388 = vpop.permute.xlu0 %1387
          %v1391 = vsel %vm1331, %v1309, 0
          %1393 = vmatprep.subr.bf16.mxu0 0
          %1394 = vmatpush1.bf16.msra.mxu0 %v1391
          %1395 = vmatprep.subr.bf16.mxu0 0
          %1396 = vmatpush1.bf16.msra.mxu0 0
          %1397 = vmatprep.subr.bf16.mxu0 0
          %1398 = vmatpush1.bf16.msra.mxu0 0
          %1399 = vmatprep.subr.bf16.mxu0 0
          %1400 = vmatpush1.bf16.msra.mxu0 0
          %1401 = vmatprep.subr.bf16.mxu0 0
          %1402 = vmatpush1.bf16.msra.mxu0 0
          %1403 = vmatprep.subr.bf16.mxu0 0
          %1404 = vmatpush1.bf16.msra.mxu0 0
          %1405 = vmatprep.subr.bf16.mxu0 0
          %1406 = vmatpush1.bf16.msra.mxu0 0
          %1407 = vmatprep.subr.bf16.mxu0 0
          %1408 = vmatpush1.bf16.msra.mxu0 0
          %1409 = vmatprep.subr.bf16.mxu0 0
          %1410 = vmatpush1.bf16.msra.mxu0 0
          %1411 = vmatprep.subr.bf16.mxu0 0
          %1412 = vmatpush1.bf16.msra.mxu0 0
          %1413 = vmatprep.subr.bf16.mxu0 0
          %1414 = vmatpush1.bf16.msra.mxu0 0
          %1415 = vmatprep.subr.bf16.mxu0 0
          %1416 = vmatpush1.bf16.msra.mxu0 0
          %1417 = vmatprep.subr.bf16.mxu0 0
          %1418 = vmatpush1.bf16.msra.mxu0 0
          %1419 = vmatprep.subr.bf16.mxu0 0
          %1420 = vmatpush1.bf16.msra.mxu0 0
          %1421 = vmatprep.subr.bf16.mxu0 0
          %1422 = vmatpush1.bf16.msra.mxu0 0
          %1423 = vmatprep.subr.bf16.mxu0 0
          %1424 = vmatpush1.bf16.msra.mxu0 0
          %1425 = vmatprep.mubr.bf16.mxu0 0
          %1426 = vmatmul.mubr.bf16.gmra.mrb[0].mxu0 %v1329
          %v1427 = vpop.f32.mrb[0].mxu0
          %v1428 = vadd.f32 %v1383, %v1427
          %v1429 = vpop.f32.mrb[0].mxu0
          %v1430 = vpop.f32.mrb[0].mxu0
          %v1431 = vadd.f32 %v1388, %v1430
          %v1432 = vpop.f32.mrb[0].mxu0
          %1433 = vdwg.mxu0
          %v1434 = vpack.c.bf16 %v1431, %v1428
          %1435 = vst.msk [vmem:[#allocation4] sm:$0xff] %vm1087, %v1434
        $region208: #{linformer_forward.2} parent=111 // pred_fallthru
          _
        %v1436 = vld [vmem:[%s912] sm:$0xff]
        %v1437 = vpack.c.bf16 %v1436, %v1436
        %v1438 = vld [vmem:[#allocation11] sm:$0xf]
        %v1439 = vld [vmem:[#allocation11 + $0x4] sm:$0xf]
        %v1440 = vld [vmem:[#allocation11 + $0x8] sm:$0xf]
        %v1441 = vld [vmem:[#allocation11 + $0xc] sm:$0xf]
        %v1446 = vunpack.c.l.b16 %v1438
        %v1447 = vunpack.c.l.b16 %v1439
        %v1448 = vunpack.c.l.b16 %v1440
        %v1449 = vunpack.c.l.b16 %v1441
        %v1450 = vpack.c.b16 %v1447, %v1446
        %v1451 = vpack.c.b16 %v1449, %v1448
        %vm1454 = vcmask 261120
        %v1456 = vsel %vm1454, %v1437, 0
        %1458 = vmatprep.subr.bf16.mxu0 0
        %1459 = vmatpush1.bf16.msra.mxu0 %v1450
        %1460 = vmatprep.subr.bf16.mxu0 0
        %1461 = vmatpush1.bf16.msra.mxu0 %v1451
        %1462 = vmatprep.subr.bf16.mxu0 0
        %1463 = vmatpush1.bf16.msra.mxu0 0
        %1464 = vmatprep.subr.bf16.mxu0 0
        %1465 = vmatpush1.bf16.msra.mxu0 0
        %1466 = vmatprep.subr.bf16.mxu0 0
        %1467 = vmatpush1.bf16.msra.mxu0 0
        %1468 = vmatprep.subr.bf16.mxu0 0
        %1469 = vmatpush1.bf16.msra.mxu0 0
        %1470 = vmatprep.subr.bf16.mxu0 0
        %1471 = vmatpush1.bf16.msra.mxu0 0
        %1472 = vmatprep.subr.bf16.mxu0 0
        %1473 = vmatpush1.bf16.msra.mxu0 0
        %1474 = vmatprep.subr.bf16.mxu0 0
        %1475 = vmatpush1.bf16.msra.mxu0 0
        %1476 = vmatprep.subr.bf16.mxu0 0
        %1477 = vmatpush1.bf16.msra.mxu0 0
        %1478 = vmatprep.subr.bf16.mxu0 0
        %1479 = vmatpush1.bf16.msra.mxu0 0
        %1480 = vmatprep.subr.bf16.mxu0 0
        %1481 = vmatpush1.bf16.msra.mxu0 0
        %1482 = vmatprep.subr.bf16.mxu0 0
        %1483 = vmatpush1.bf16.msra.mxu0 0
        %1484 = vmatprep.subr.bf16.mxu0 0
        %1485 = vmatpush1.bf16.msra.mxu0 0
        %1486 = vmatprep.subr.bf16.mxu0 0
        %1487 = vmatpush1.bf16.msra.mxu0 0
        %1488 = vmatprep.subr.bf16.mxu0 0
        %1489 = vmatpush1.bf16.msra.mxu0 0
        %1490 = vmatprep.mubr.bf16.mxu0 0
        %1491 = vmatmul.mubr.bf16.gmra.mrb[0].mxu0 %v1456
        %v1492 = vpop.f32.mrb[0].mxu0
        %v1493 = vadd.f32 0.0, %v1492
        %v1494 = vpop.f32.mrb[0].mxu0
        %v1495 = vpop.f32.mrb[0].mxu0
        %v1496 = vpop.f32.mrb[0].mxu0
        %1497 = vdwg.mxu0
        %v1498 = vpack.c.bf16 %v1493, %v1493
        %v1499 = vld [vmem:[#allocation15] sm:$0xf]
        %v1500 = vld [vmem:[#allocation15 + $0x4] sm:$0xf]
        %v1501 = vld [vmem:[#allocation17] sm:$0x1]
        %v1503 = vlaneseq
        %v1504 = vshrl.u32 %v1503, 7
        %v1505 = vsub.s32 0, %v1504
        %v1506 = vrot.slane %v1501, %v1505
        %v1510 = vunpack.c.l.b16 %v1499
        %v1511 = vunpack.c.l.b16 %v1500
        %v1512 = vpack.c.b16 %v1511, %v1510
        %vm1514 = vcmask 130048
        %v1516 = vsel %vm1514, %v1498, 0
        %1518 = vmatprep.subr.bf16.mxu0 0
        %1519 = vmatpush1.bf16.msra.mxu0 %v1512
        %1520 = vmatprep.subr.bf16.mxu0 0
        %1521 = vmatpush1.bf16.msra.mxu0 0
        %1522 = vmatprep.subr.bf16.mxu0 0
        %1523 = vmatpush1.bf16.msra.mxu0 0
        %1524 = vmatprep.subr.bf16.mxu0 0
        %1525 = vmatpush1.bf16.msra.mxu0 0
        %1526 = vmatprep.subr.bf16.mxu0 0
        %1527 = vmatpush1.bf16.msra.mxu0 0
        %1528 = vmatprep.subr.bf16.mxu0 0
        %1529 = vmatpush1.bf16.msra.mxu0 0
        %1530 = vmatprep.subr.bf16.mxu0 0
        %1531 = vmatpush1.bf16.msra.mxu0 0
        %1532 = vmatprep.subr.bf16.mxu0 0
        %1533 = vmatpush1.bf16.msra.mxu0 0
        %1534 = vmatprep.subr.bf16.mxu0 0
        %1535 = vmatpush1.bf16.msra.mxu0 0
        %1536 = vmatprep.subr.bf16.mxu0 0
        %1537 = vmatpush1.bf16.msra.mxu0 0
        %1538 = vmatprep.subr.bf16.mxu0 0
        %1539 = vmatpush1.bf16.msra.mxu0 0
        %1540 = vmatprep.subr.bf16.mxu0 0
        %1541 = vmatpush1.bf16.msra.mxu0 0
        %1542 = vmatprep.subr.bf16.mxu0 0
        %1543 = vmatpush1.bf16.msra.mxu0 0
        %1544 = vmatprep.subr.bf16.mxu0 0
        %1545 = vmatpush1.bf16.msra.mxu0 0
        %1546 = vmatprep.subr.bf16.mxu0 0
        %1547 = vmatpush1.bf16.msra.mxu0 0
        %1548 = vmatprep.subr.bf16.mxu0 0
        %1549 = vmatpush1.bf16.msra.mxu0 0
        %1550 = vmatprep.mubr.bf16.mxu0 0
        %1551 = vmatmul.mubr.bf16.gmra.mrb[0].mxu0 %v1516
        %v1552 = vpop.f32.mrb[0].mxu0
        %v1553 = vadd.f32 %v1506, %v1552
        %v1554 = vpop.f32.mrb[0].mxu0
        %v1555 = vpop.f32.mrb[0].mxu0
        %v1556 = vpop.f32.mrb[0].mxu0
        %1557 = vdwg.mxu0
        %v1558 = vpack.c.bf16 %v1553, %v1553
        %vm1559 = vcmask 257024
        %1560 = vst.msk [vmem:[#allocation2] sm:$0xf] %vm1559, %v1558
        %v1561 = vld [vmem:[#allocation2] sm:$0xf]
        %v1562 = vld [vmem:[#allocation3] sm:$0xff]
        %v1563 = vld [vmem:[#allocation4] sm:$0xff]
        %v1565 = vsel %vm1514, %v1561, 0
        %v1568 = vsel %vm1514, %v1562, 0
        %1570 = vmatprep.subr.bf16.mxu0 0
        %1571 = vmatpush1.bf16.xpose.msra.mxu0 %v1568
        %1572 = vmatprep.subr.bf16.mxu0 0
        %1573 = vmatpush1.bf16.xpose.msra.mxu0 0
        %1574 = vmatprep.subr.bf16.mxu0 0
        %1575 = vmatpush1.bf16.xpose.msra.mxu0 0
        %1576 = vmatprep.subr.bf16.mxu0 0
        %1577 = vmatpush1.bf16.xpose.msra.mxu0 0
        %1578 = vmatprep.subr.bf16.mxu0 0
        %1579 = vmatpush1.bf16.xpose.msra.mxu0 0
        %1580 = vmatprep.subr.bf16.mxu0 0
        %1581 = vmatpush1.bf16.xpose.msra.mxu0 0
        %1582 = vmatprep.subr.bf16.mxu0 0
        %1583 = vmatpush1.bf16.xpose.msra.mxu0 0
        %1584 = vmatprep.subr.bf16.mxu0 0
        %1585 = vmatpush1.bf16.xpose.msra.mxu0 0
        %1586 = vmatprep.subr.bf16.mxu0 0
        %1587 = vmatpush1.bf16.xpose.msra.mxu0 0
        %1588 = vmatprep.subr.bf16.mxu0 0
        %1589 = vmatpush1.bf16.xpose.msra.mxu0 0
        %1590 = vmatprep.subr.bf16.mxu0 0
        %1591 = vmatpush1.bf16.xpose.msra.mxu0 0
        %1592 = vmatprep.subr.bf16.mxu0 0
        %1593 = vmatpush1.bf16.xpose.msra.mxu0 0
        %1594 = vmatprep.subr.bf16.mxu0 0
        %1595 = vmatpush1.bf16.xpose.msra.mxu0 0
        %1596 = vmatprep.subr.bf16.mxu0 0
        %1597 = vmatpush1.bf16.xpose.msra.mxu0 0
        %1598 = vmatprep.subr.bf16.mxu0 0
        %1599 = vmatpush1.bf16.xpose.msra.mxu0 0
        %1600 = vmatprep.subr.bf16.mxu0 0
        %1601 = vmatpush1.bf16.xpose.msra.mxu0 0
        %1602 = vmatprep.mubr.bf16.mxu0 0
        %1603 = vmatmul.mubr.bf16.gmra.mrb[0].mxu0 %v1565
        %v1604 = vpop.f32.mrb[0].mxu0
        %v1605 = vadd.f32 0.0, %v1604
        %v1606 = vpop.f32.mrb[0].mxu0
        %v1607 = vpop.f32.mrb[0].mxu0
        %v1608 = vpop.f32.mrb[0].mxu0
        %1609 = vdwg.mxu0
        %v1610 = vmul.f32 %v1605, 0.25
        %v1611 = vsel %vm1514, %v1610, -inf
        %1612 = vmax.xlane.f32.xlu0 %v1611
        %v1613 = vpop.xlane.xlu0 %1612
        %v1614 = vsub.f32 %v1610, %v1613
        %v1615 = vmul.f32 %v1614, 1.442695
        %v1616 = vpow.pop %v1615
        %v1617 = vsel %vm1514, %v1616, 0.0
        %1618 = vadd.xlane.f32.xlu0 %v1617
        %v1619 = vpop.xlane.xlu0 %1618
        %v1620 = vrcp.pop %v1619
        %v1621 = vmul.f32 %v1616, %v1620
        %v1622 = vpack.c.bf16 %v1621, %v1621
        %v1624 = vsel %vm1514, %v1622, 0
        %1626 = vmatprep.subr.bf16.mxu0 0
        %1627 = vmatpush1.bf16.msra.mxu0 %v1563
        %1628 = vmatprep.subr.bf16.mxu0 0
        %1629 = vmatpush1.bf16.msra.mxu0 0
        %1630 = vmatprep.subr.bf16.mxu0 0
        %1631 = vmatpush1.bf16.msra.mxu0 0
        %1632 = vmatprep.subr.bf16.mxu0 0
        %1633 = vmatpush1.bf16.msra.mxu0 0
        %1634 = vmatprep.subr.bf16.mxu0 0
        %1635 = vmatpush1.bf16.msra.mxu0 0
        %1636 = vmatprep.subr.bf16.mxu0 0
        %1637 = vmatpush1.bf16.msra.mxu0 0
        %1638 = vmatprep.subr.bf16.mxu0 0
        %1639 = vmatpush1.bf16.msra.mxu0 0
        %1640 = vmatprep.subr.bf16.mxu0 0
        %1641 = vmatpush1.bf16.msra.mxu0 0
        %1642 = vmatprep.subr.bf16.mxu0 0
        %1643 = vmatpush1.bf16.msra.mxu0 0
        %1644 = vmatprep.subr.bf16.mxu0 0
        %1645 = vmatpush1.bf16.msra.mxu0 0
        %1646 = vmatprep.subr.bf16.mxu0 0
        %1647 = vmatpush1.bf16.msra.mxu0 0
        %1648 = vmatprep.subr.bf16.mxu0 0
        %1649 = vmatpush1.bf16.msra.mxu0 0
        %1650 = vmatprep.subr.bf16.mxu0 0
        %1651 = vmatpush1.bf16.msra.mxu0 0
        %1652 = vmatprep.subr.bf16.mxu0 0
        %1653 = vmatpush1.bf16.msra.mxu0 0
        %1654 = vmatprep.subr.bf16.mxu0 0
        %1655 = vmatpush1.bf16.msra.mxu0 0
        %1656 = vmatprep.subr.bf16.mxu0 0
        %1657 = vmatpush1.bf16.msra.mxu0 0
        %1658 = vmatprep.mubr.bf16.mxu0 0
        %1659 = vmatmul.mubr.bf16.gmra.mrb[0].mxu0 %v1624
        %v1660 = vpop.f32.mrb[0].mxu0
        %v1661 = vadd.f32 0.0, %v1660
        %v1662 = vpop.f32.mrb[0].mxu0
        %v1663 = vpop.f32.mrb[0].mxu0
        %v1664 = vpop.f32.mrb[0].mxu0
        %1665 = vdwg.mxu0
        %v1666 = vpack.c.bf16 %v1661, %v1661
        %vm1667 = vcmask 125952
        %1668 = vst.msk [vmem:[#allocation5] sm:$0xf] %vm1667, %v1666
        %v1669 = vld [vmem:[#allocation2] sm:$0xf]
        %v1670 = vld [vmem:[#allocation3] sm:$0xff]
        %v1671 = vld [vmem:[#allocation4] sm:$0xff]
        %v1673 = vunpack.c.l.b16 %v1669
        %v1674 = vpack.c.b16 %v1673, %v1673
        %1675 = vrot.lane.b32.xlu0 %v1674, 112
        %v1676 = vpop.permute.xlu0 %1675
        %1678 = vrot.lane.b32.xlu0 %v1670, 112
        %v1679 = vpop.permute.xlu0 %1678
        %v1681 = vsel %vm1514, %v1676, 0
        %v1684 = vsel %vm1514, %v1679, 0
        %1686 = vmatprep.subr.bf16.mxu0 0
        %1687 = vmatpush1.bf16.xpose.msra.mxu0 %v1684
        %1688 = vmatprep.subr.bf16.mxu0 0
        %1689 = vmatpush1.bf16.xpose.msra.mxu0 0
        %1690 = vmatprep.subr.bf16.mxu0 0
        %1691 = vmatpush1.bf16.xpose.msra.mxu0 0
        %1692 = vmatprep.subr.bf16.mxu0 0
        %1693 = vmatpush1.bf16.xpose.msra.mxu0 0
        %1694 = vmatprep.subr.bf16.mxu0 0
        %1695 = vmatpush1.bf16.xpose.msra.mxu0 0
        %1696 = vmatprep.subr.bf16.mxu0 0
        %1697 = vmatpush1.bf16.xpose.msra.mxu0 0
        %1698 = vmatprep.subr.bf16.mxu0 0
        %1699 = vmatpush1.bf16.xpose.msra.mxu0 0
        %1700 = vmatprep.subr.bf16.mxu0 0
        %1701 = vmatpush1.bf16.xpose.msra.mxu0 0
        %1702 = vmatprep.subr.bf16.mxu0 0
        %1703 = vmatpush1.bf16.xpose.msra.mxu0 0
        %1704 = vmatprep.subr.bf16.mxu0 0
        %1705 = vmatpush1.bf16.xpose.msra.mxu0 0
        %1706 = vmatprep.subr.bf16.mxu0 0
        %1707 = vmatpush1.bf16.xpose.msra.mxu0 0
        %1708 = vmatprep.subr.bf16.mxu0 0
        %1709 = vmatpush1.bf16.xpose.msra.mxu0 0
        %1710 = vmatprep.subr.bf16.mxu0 0
        %1711 = vmatpush1.bf16.xpose.msra.mxu0 0
        %1712 = vmatprep.subr.bf16.mxu0 0
        %1713 = vmatpush1.bf16.xpose.msra.mxu0 0
        %1714 = vmatprep.subr.bf16.mxu0 0
        %1715 = vmatpush1.bf16.xpose.msra.mxu0 0
        %1716 = vmatprep.subr.bf16.mxu0 0
        %1717 = vmatpush1.bf16.xpose.msra.mxu0 0
        %1718 = vmatprep.mubr.bf16.mxu0 0
        %1719 = vmatmul.mubr.bf16.gmra.mrb[0].mxu0 %v1681
        %v1720 = vpop.f32.mrb[0].mxu0
        %v1721 = vadd.f32 0.0, %v1720
        %v1722 = vpop.f32.mrb[0].mxu0
        %v1723 = vpop.f32.mrb[0].mxu0
        %v1724 = vpop.f32.mrb[0].mxu0
        %1725 = vdwg.mxu0
        %v1726 = vmul.f32 %v1721, 0.25
        %v1727 = vsel %vm1514, %v1726, -inf
        %1728 = vmax.xlane.f32.xlu0 %v1727
        %v1729 = vpop.xlane.xlu0 %1728
        %v1730 = vsub.f32 %v1726, %v1729
        %v1731 = vmul.f32 %v1730, 1.442695
        %v1732 = vpow.pop %v1731
        %v1733 = vsel %vm1514, %v1732, 0.0
        %1734 = vadd.xlane.f32.xlu0 %v1733
        %v1735 = vpop.xlane.xlu0 %1734
        %v1736 = vrcp.pop %v1735
        %v1737 = vmul.f32 %v1732, %v1736
        %v1738 = vpack.c.bf16 %v1737, %v1737
        %1740 = vrot.lane.b32.xlu0 %v1671, 112
        %v1741 = vpop.permute.xlu0 %1740
        %v1744 = vsel %vm1514, %v1738, 0
        %1746 = vmatprep.subr.bf16.mxu0 0
        %1747 = vmatpush1.bf16.msra.mxu0 %v1741
        %1748 = vmatprep.subr.bf16.mxu0 0
        %1749 = vmatpush1.bf16.msra.mxu0 0
        %1750 = vmatprep.subr.bf16.mxu0 0
        %1751 = vmatpush1.bf16.msra.mxu0 0
        %1752 = vmatprep.subr.bf16.mxu0 0
        %1753 = vmatpush1.bf16.msra.mxu0 0
        %1754 = vmatprep.subr.bf16.mxu0 0
        %1755 = vmatpush1.bf16.msra.mxu0 0
        %1756 = vmatprep.subr.bf16.mxu0 0
        %1757 = vmatpush1.bf16.msra.mxu0 0
        %1758 = vmatprep.subr.bf16.mxu0 0
        %1759 = vmatpush1.bf16.msra.mxu0 0
        %1760 = vmatprep.subr.bf16.mxu0 0
        %1761 = vmatpush1.bf16.msra.mxu0 0
        %1762 = vmatprep.subr.bf16.mxu0 0
        %1763 = vmatpush1.bf16.msra.mxu0 0
        %1764 = vmatprep.subr.bf16.mxu0 0
        %1765 = vmatpush1.bf16.msra.mxu0 0
        %1766 = vmatprep.subr.bf16.mxu0 0
        %1767 = vmatpush1.bf16.msra.mxu0 0
        %1768 = vmatprep.subr.bf16.mxu0 0
        %1769 = vmatpush1.bf16.msra.mxu0 0
        %1770 = vmatprep.subr.bf16.mxu0 0
        %1771 = vmatpush1.bf16.msra.mxu0 0
        %1772 = vmatprep.subr.bf16.mxu0 0
        %1773 = vmatpush1.bf16.msra.mxu0 0
        %1774 = vmatprep.subr.bf16.mxu0 0
        %1775 = vmatpush1.bf16.msra.mxu0 0
        %1776 = vmatprep.subr.bf16.mxu0 0
        %1777 = vmatpush1.bf16.msra.mxu0 0
        %1778 = vmatprep.mubr.bf16.mxu0 0
        %1779 = vmatmul.mubr.bf16.gmra.mrb[0].mxu0 %v1744
        %v1780 = vpop.f32.mrb[0].mxu0
        %v1781 = vadd.f32 0.0, %v1780
        %v1782 = vpop.f32.mrb[0].mxu0
        %v1783 = vpop.f32.mrb[0].mxu0
        %v1784 = vpop.f32.mrb[0].mxu0
        %1785 = vdwg.mxu0
        %v1786 = vpack.c.bf16 %v1781, %v1781
        %v1788 = vunpack.c.l.b16 %v1786
        %v1789 = vpack.c.b16 %v1788, %v1788
        %1790 = vrot.lane.b32.xlu0 %v1789, 16
        %v1791 = vpop.permute.xlu0 %1790
        %vm1793 = vcmask 257152
        %1794 = vst.msk [vmem:[#allocation5] sm:$0xf] %vm1793, %v1791
        %v1795 = vld [vmem:[#allocation5] sm:$0xf]
        %v1796 = vld [vmem:[#allocation27] sm:$0xf]
        %v1797 = vld [vmem:[#allocation27 + $0x4] sm:$0xf]
        %v1798 = vld [vmem:[#allocation27 + $0x8] sm:$0xf]
        %v1799 = vld [vmem:[#allocation27 + $0xc] sm:$0xf]
        %v1800 = vld [vmem:[#allocation29] sm:$0x1]
        %v1802 = vlaneseq
        %v1803 = vshrl.u32 %v1802, 7
        %v1804 = vsub.s32 0, %v1803
        %v1805 = vrot.slane %v1800, %v1804
        %v1811 = vunpack.c.l.b16 %v1796
        %v1812 = vunpack.c.l.b16 %v1797
        %v1813 = vunpack.c.l.b16 %v1798
        %v1814 = vunpack.c.l.b16 %v1799
        %v1815 = vpack.c.b16 %v1812, %v1811
        %v1816 = vpack.c.b16 %v1814, %v1813
        %v1820 = vsel %vm1454, %v1795, 0
        %1822 = vmatprep.subr.bf16.mxu0 0
        %1823 = vmatpush1.bf16.msra.mxu0 %v1815
        %1824 = vmatprep.subr.bf16.mxu0 0
        %1825 = vmatpush1.bf16.msra.mxu0 %v1816
        %1826 = vmatprep.subr.bf16.mxu0 0
        %1827 = vmatpush1.bf16.msra.mxu0 0
        %1828 = vmatprep.subr.bf16.mxu0 0
        %1829 = vmatpush1.bf16.msra.mxu0 0
        %1830 = vmatprep.subr.bf16.mxu0 0
        %1831 = vmatpush1.bf16.msra.mxu0 0
        %1832 = vmatprep.subr.bf16.mxu0 0
        %1833 = vmatpush1.bf16.msra.mxu0 0
        %1834 = vmatprep.subr.bf16.mxu0 0
        %1835 = vmatpush1.bf16.msra.mxu0 0
        %1836 = vmatprep.subr.bf16.mxu0 0
        %1837 = vmatpush1.bf16.msra.mxu0 0
        %1838 = vmatprep.subr.bf16.mxu0 0
        %1839 = vmatpush1.bf16.msra.mxu0 0
        %1840 = vmatprep.subr.bf16.mxu0 0
        %1841 = vmatpush1.bf16.msra.mxu0 0
        %1842 = vmatprep.subr.bf16.mxu0 0
        %1843 = vmatpush1.bf16.msra.mxu0 0
        %1844 = vmatprep.subr.bf16.mxu0 0
        %1845 = vmatpush1.bf16.msra.mxu0 0
        %1846 = vmatprep.subr.bf16.mxu0 0
        %1847 = vmatpush1.bf16.msra.mxu0 0
        %1848 = vmatprep.subr.bf16.mxu0 0
        %1849 = vmatpush1.bf16.msra.mxu0 0
        %1850 = vmatprep.subr.bf16.mxu0 0
        %1851 = vmatpush1.bf16.msra.mxu0 0
        %1852 = vmatprep.subr.bf16.mxu0 0
        %1853 = vmatpush1.bf16.msra.mxu0 0
        %1854 = vmatprep.mubr.bf16.mxu0 0
        %1855 = vmatmul.mubr.bf16.gmra.mrb[0].mxu0 %v1820
        %v1856 = vpop.f32.mrb[0].mxu0
        %v1857 = vadd.f32 %v1805, %v1856
        %v1858 = vpop.f32.mrb[0].mxu0
        %v1859 = vpop.f32.mrb[0].mxu0
        %v1860 = vpop.f32.mrb[0].mxu0
        %1861 = vdwg.mxu0
        %v1862 = vadd.f32 %v1857, %v1436
        %v1863 = vld [vmem:[#allocation30] sm:$0x1]
        %v1864 = vld [vmem:[#allocation32] sm:$0x1]
        %v1865 = vsel %vm1454, %v1862, 0.0
        %1866 = vadd.xlane.f32.xlu0 %v1865
        %v1867 = vpop.xlane.xlu0 %1866
        %v1868 = vrcp.pop 32.0
        %v1869 = vmul.f32 %v1867, %v1868
        %v1870 = vsub.f32 %v1862, %v1869
        %v1871 = vmul.f32 %v1870, %v1870
        %v1872 = vsel %vm1454, %v1871, 0.0
        %1873 = vadd.xlane.f32.xlu0 %v1872
        %v1874 = vpop.xlane.xlu0 %1873
        %v1875 = vmul.f32 %v1874, %v1868
        %v1876 = vadd.f32 %v1875, 1e-05
        %v1877 = vrsqrt.pop %v1876
        %v1878 = vmul.f32 %v1870, %v1877
        %v1880 = vlaneseq
        %v1881 = vshrl.u32 %v1880, 7
        %v1882 = vsub.s32 0, %v1881
        %v1883 = vrot.slane %v1863, %v1882
        %v1885 = vmul.f32 %v1878, %v1883
        %v1887 = vlaneseq
        %v1888 = vshrl.u32 %v1887, 7
        %v1889 = vsub.s32 0, %v1888
        %v1890 = vrot.slane %v1864, %v1889
        %v1892 = vadd.f32 %v1885, %v1890
        %v1893 = vpack.c.bf16 %v1892, %v1892
        %v1894 = vld [vmem:[#allocation33] sm:$0xf]
        %v1895 = vld [vmem:[#allocation33 + $0x4] sm:$0xf]
        %v1896 = vld [vmem:[#allocation33 + $0x8] sm:$0xf]
        %v1897 = vld [vmem:[#allocation33 + $0xc] sm:$0xf]
        %v1898 = vld [vmem:[#allocation35] sm:$0x1]
        %v1900 = vlaneseq
        %v1901 = vshrl.u32 %v1900, 7
        %v1902 = vsub.s32 0, %v1901
        %v1903 = vrot.slane %v1898, %v1902
        %v1909 = vunpack.c.l.b16 %v1894
        %v1910 = vunpack.c.l.b16 %v1895
        %v1911 = vunpack.c.l.b16 %v1896
        %v1912 = vunpack.c.l.b16 %v1897
        %v1913 = vpack.c.b16 %v1910, %v1909
        %v1914 = vpack.c.b16 %v1912, %v1911
        %v1918 = vsel %vm1454, %v1893, 0
        %1920 = vmatprep.subr.bf16.mxu0 0
        %1921 = vmatpush1.bf16.msra.mxu0 %v1913
        %1922 = vmatprep.subr.bf16.mxu0 0
        %1923 = vmatpush1.bf16.msra.mxu0 %v1914
        %1924 = vmatprep.subr.bf16.mxu0 0
        %1925 = vmatpush1.bf16.msra.mxu0 0
        %1926 = vmatprep.subr.bf16.mxu0 0
        %1927 = vmatpush1.bf16.msra.mxu0 0
        %1928 = vmatprep.subr.bf16.mxu0 0
        %1929 = vmatpush1.bf16.msra.mxu0 0
        %1930 = vmatprep.subr.bf16.mxu0 0
        %1931 = vmatpush1.bf16.msra.mxu0 0
        %1932 = vmatprep.subr.bf16.mxu0 0
        %1933 = vmatpush1.bf16.msra.mxu0 0
        %1934 = vmatprep.subr.bf16.mxu0 0
        %1935 = vmatpush1.bf16.msra.mxu0 0
        %1936 = vmatprep.subr.bf16.mxu0 0
        %1937 = vmatpush1.bf16.msra.mxu0 0
        %1938 = vmatprep.subr.bf16.mxu0 0
        %1939 = vmatpush1.bf16.msra.mxu0 0
        %1940 = vmatprep.subr.bf16.mxu0 0
        %1941 = vmatpush1.bf16.msra.mxu0 0
        %1942 = vmatprep.subr.bf16.mxu0 0
        %1943 = vmatpush1.bf16.msra.mxu0 0
        %1944 = vmatprep.subr.bf16.mxu0 0
        %1945 = vmatpush1.bf16.msra.mxu0 0
        %1946 = vmatprep.subr.bf16.mxu0 0
        %1947 = vmatpush1.bf16.msra.mxu0 0
        %1948 = vmatprep.subr.bf16.mxu0 0
        %1949 = vmatpush1.bf16.msra.mxu0 0
        %1950 = vmatprep.subr.bf16.mxu0 0
        %1951 = vmatpush1.bf16.msra.mxu0 0
        %1952 = vmatprep.mubr.bf16.mxu0 0
        %1953 = vmatmul.mubr.bf16.gmra.mrb[0].mxu0 %v1918
        %v1954 = vpop.f32.mrb[0].mxu0
        %v1955 = vadd.f32 %v1903, %v1954
        %v1956 = vpop.f32.mrb[0].mxu0
        %v1957 = vpop.f32.mrb[0].mxu0
        %v1958 = vpop.f32.mrb[0].mxu0
        %1959 = vdwg.mxu0
        %v1960 = vmul.f32 %v1955, 0.5
        %v1961 = vmul.f32 %v1955, 0.70710677
        %v1962 = vand.u32 2147483647, %v1961
        %v1963 = vmul.f32 %v1962, 0.3275911
        %v1964 = vadd.f32 %v1963, 1.0
        %v1965 = vrcp.pop %v1964
        %v1966 = vmul.f32 1.0, %v1965
        %v1967 = vmul.f32 %v1966, 1.0614054
        %v1968 = vadd.f32 %v1967, -1.4531521
        %v1969 = vmul.f32 %v1968, %v1966
        %v1970 = vadd.f32 %v1969, 1.4214138
        %v1971 = vmul.f32 %v1970, %v1966
        %v1972 = vadd.f32 %v1971, -0.28449672
        %v1973 = vmul.f32 %v1972, %v1966
        %v1974 = vadd.f32 %v1973, 0.2548296
        %v1975 = vmul.f32 %v1974, %v1966
        %v1976 = vsub.f32 0.0, %v1962
        %v1977 = vmul.f32 %v1976, %v1962
        %v1978 = vmul.f32 %v1977, 1.442695
        %v1979 = vpow.pop %v1978
        %v1980 = vmul.f32 %v1975, %v1979
        %v1981 = vsub.f32 1.0, %v1980
        %vm1982 = vcmp.ge.f32.partialorder %v1961, 0.0
        %v1983 = vsub.f32 0.0, %v1981
        %v1984 = vsel %vm1982, %v1981, %v1983
        %v1985 = vadd.f32 %v1984, 1.0
        %v1986 = vmul.f32 %v1960, %v1985
        %v1987 = vpack.c.bf16 %v1986, %v1986
        %v1988 = vld [vmem:[#allocation36] sm:$0xf]
        %v1989 = vld [vmem:[#allocation36 + $0x4] sm:$0xf]
        %v1990 = vld [vmem:[#allocation36 + $0x8] sm:$0xf]
        %v1991 = vld [vmem:[#allocation36 + $0xc] sm:$0xf]
        %v1992 = vld [vmem:[#allocation36 + $0x10] sm:$0xf]
        %v1993 = vld [vmem:[#allocation36 + $0x14] sm:$0xf]
        %v1994 = vld [vmem:[#allocation36 + $0x18] sm:$0xf]
        %v1995 = vld [vmem:[#allocation36 + $0x1c] sm:$0xf]
        %v1996 = vld [vmem:[#allocation38] sm:$0x1]
        %v1998 = vlaneseq
        %v1999 = vshrl.u32 %v1998, 7
        %v2000 = vsub.s32 0, %v1999
        %v2001 = vrot.slane %v1996, %v2000
        %v2011 = vunpack.c.l.b16 %v1988
        %v2012 = vunpack.c.l.b16 %v1989
        %v2013 = vunpack.c.l.b16 %v1990
        %v2014 = vunpack.c.l.b16 %v1991
        %v2015 = vunpack.c.l.b16 %v1992
        %v2016 = vunpack.c.l.b16 %v1993
        %v2017 = vunpack.c.l.b16 %v1994
        %v2018 = vunpack.c.l.b16 %v1995
        %v2019 = vpack.c.b16 %v2012, %v2011
        %v2020 = vpack.c.b16 %v2014, %v2013
        %v2021 = vpack.c.b16 %v2016, %v2015
        %v2022 = vpack.c.b16 %v2018, %v2017
        %vm2027 = vcmask 523264
        %v2029 = vsel %vm2027, %v1987, 0
        %2031 = vmatprep.subr.bf16.mxu0 0
        %2032 = vmatpush1.bf16.msra.mxu0 %v2019
        %2033 = vmatprep.subr.bf16.mxu0 0
        %2034 = vmatpush1.bf16.msra.mxu0 %v2020
        %2035 = vmatprep.subr.bf16.mxu0 0
        %2036 = vmatpush1.bf16.msra.mxu0 %v2021
        %2037 = vmatprep.subr.bf16.mxu0 0
        %2038 = vmatpush1.bf16.msra.mxu0 %v2022
        %2039 = vmatprep.subr.bf16.mxu0 0
        %2040 = vmatpush1.bf16.msra.mxu0 0
        %2041 = vmatprep.subr.bf16.mxu0 0
        %2042 = vmatpush1.bf16.msra.mxu0 0
        %2043 = vmatprep.subr.bf16.mxu0 0
        %2044 = vmatpush1.bf16.msra.mxu0 0
        %2045 = vmatprep.subr.bf16.mxu0 0
        %2046 = vmatpush1.bf16.msra.mxu0 0
        %2047 = vmatprep.subr.bf16.mxu0 0
        %2048 = vmatpush1.bf16.msra.mxu0 0
        %2049 = vmatprep.subr.bf16.mxu0 0
        %2050 = vmatpush1.bf16.msra.mxu0 0
        %2051 = vmatprep.subr.bf16.mxu0 0
        %2052 = vmatpush1.bf16.msra.mxu0 0
        %2053 = vmatprep.subr.bf16.mxu0 0
        %2054 = vmatpush1.bf16.msra.mxu0 0
        %2055 = vmatprep.subr.bf16.mxu0 0
        %2056 = vmatpush1.bf16.msra.mxu0 0
        %2057 = vmatprep.subr.bf16.mxu0 0
        %2058 = vmatpush1.bf16.msra.mxu0 0
        %2059 = vmatprep.subr.bf16.mxu0 0
        %2060 = vmatpush1.bf16.msra.mxu0 0
        %2061 = vmatprep.subr.bf16.mxu0 0
        %2062 = vmatpush1.bf16.msra.mxu0 0
        %2063 = vmatprep.mubr.bf16.mxu0 0
        %2064 = vmatmul.mubr.bf16.gmra.mrb[0].mxu0 %v2029
        %v2065 = vpop.f32.mrb[0].mxu0
        %v2066 = vadd.f32 %v2001, %v2065
        %v2067 = vpop.f32.mrb[0].mxu0
        %v2068 = vpop.f32.mrb[0].mxu0
        %v2069 = vpop.f32.mrb[0].mxu0
        %2070 = vdwg.mxu0
        %v2071 = vadd.f32 %v2066, %v1892
        %v2072 = vld [vmem:[#allocation39] sm:$0x1]
        %v2073 = vld [vmem:[#allocation41] sm:$0x1]
        %v2074 = vsel %vm1454, %v2071, 0.0
        %2075 = vadd.xlane.f32.xlu0 %v2074
        %v2076 = vpop.xlane.xlu0 %2075
        %v2077 = vmul.f32 %v2076, %v1868
        %v2078 = vsub.f32 %v2071, %v2077
        %v2079 = vmul.f32 %v2078, %v2078
        %v2080 = vsel %vm1454, %v2079, 0.0
        %2081 = vadd.xlane.f32.xlu0 %v2080
        %v2082 = vpop.xlane.xlu0 %2081
        %v2083 = vmul.f32 %v2082, %v1868
        %v2084 = vadd.f32 %v2083, 1e-05
        %v2085 = vrsqrt.pop %v2084
        %v2086 = vmul.f32 %v2078, %v2085
        %v2088 = vlaneseq
        %v2089 = vshrl.u32 %v2088, 7
        %v2090 = vsub.s32 0, %v2089
        %v2091 = vrot.slane %v2072, %v2090
        %v2093 = vmul.f32 %v2086, %v2091
        %v2095 = vlaneseq
        %v2096 = vshrl.u32 %v2095, 7
        %v2097 = vsub.s32 0, %v2096
        %v2098 = vrot.slane %v2073, %v2097
        %v2100 = vadd.f32 %v2093, %v2098
        %2101 = vst.msk [vmem:[%s1063] sm:$0xff] %vm1454, %v2100
        %s2102 = sand.u32 %s570, 1
        %s2103 = scalar_lea.sflag [#allocation8], %s2102
        %s2104 = sand.u32 %s570, 1
        %s2105 = smul.addr %s2104, 8
        %s2106 = scalar_lea.vmem [#allocation42], %s2105
        // Predicated region
        $region209: #{linformer_forward.2} parent=111 // pred_check
          %p2107 = pneg %p580
        $region210: #{linformer_forward.2} parent=111 // pred_check_branch
          %2109 = sbr.rel (%p2107) target = $region212
        $region211: #{linformer_forward.2} parent=111 // pred_region
          %s2111 = ssub.s32 128, 128
          %2112 = vsyncadd %s2103, %s2111
          %s2113 = sadd.s32 %s58, %s57
          %s2114 = smul.addr %s2113, 128
          %s2115 = scalar_lea.hbm %s23, %s2114
          %s2117 = sshll.u32 %s2106, 4
          %s2118 = int_to_ptr.vmem [resolvable:$true] %s2117
          %2120 = dma.vmem_to_hbm [thread:$0]  %s2118, 128, %s2115, %s2103
        $region212: #{linformer_forward.2} parent=111 // pred_fallthru
          _
      $region112: #{linformer_forward.2} parent=5 // pred_fallthru
        _
      %p2121 = scmp.le.s32.totalorder 2, %s48
      // Predicated region
      $region213: #{linformer_forward.2} parent=5 // pred_check
        %p2122 = pneg %p2121
      $region214: #{linformer_forward.2} parent=5 // pred_check_branch
        %2124 = sbr.rel (%p2122) target = $region216
      $region215: #{linformer_forward.2} parent=5 // pred_region
        %s2125 = ssub.s32 %s48, 2
        // Predicated region
        $region217: #{linformer_forward.2} parent=215 // pred_check
          %p2126 = pneg %p586
        $region218: #{linformer_forward.2} parent=215 // pred_check_branch
          %2128 = sbr.rel (%p2126) target = $region220
        $region219: #{linformer_forward.2} parent=215 // pred_region
          %s2129 = sand.u32 %s571, 1
          %s2130 = scalar_lea.sflag [#allocation8], %s2129
          %s2131 = sand.u32 %s571, 1
          %s2132 = smul.addr %s2131, 8
          %s2133 = scalar_lea.vmem [#allocation42], %s2132
          %2134 = dma.done %s2130, 128
        $region220: #{linformer_forward.2} parent=215 // pred_fallthru
          _
      $region216: #{linformer_forward.2} parent=5 // pred_fallthru
        _
    $region6: #{linformer_forward.2} parent=1 // loop_footer
      %s52 = sadd.s32 1, %s48
    $region7: #{linformer_forward.2} parent=1 // loop_footer_branch
      %47 = sbr.rel target = $region3
    $region8: #{linformer_forward.2} parent=1 // loop_exit
      _
    %2135 = vsyncpa [#allocation7], 1
    %s2136 = scalar_lea.sflag [#allocation7], 1
    %2137 = vsyncpa %s2136, 1
    %2138 = vsyncpa [#allocation10], 1
    %s2139 = scalar_lea.sflag [#allocation10], 1
    %2140 = vsyncpa %s2139, 1
    %2141 = vsyncpa [#allocation13], 1
    %2142 = vsyncpa [#allocation16], 1
    %2143 = vsyncpa [#allocation19], 1
    %2144 = vsyncpa [#allocation22], 1
    %2145 = vsyncpa [#allocation25], 1
    %2146 = vsyncpa [#allocation28], 1
    %2147 = vsyncpa [#allocation31], 1
    %2148 = vsyncpa [#allocation34], 1
    %2149 = vsyncpa [#allocation37], 1
    %2150 = vsyncpa [#allocation40], 1
    %2151 = vsyncpa [#allocation8], 1
    %s2152 = scalar_lea.sflag [#allocation8], 1
    %2153 = vsyncpa %s2152, 1

</llo_original>
